<compile_context>
chip_gen: v5e
topology: v5e:2x2
jax: 0.10.0
libtpu: 0.0.40
codegen_flags: <defaults>
</compile_context>

<pallas_src>
import functools

import jax
import jax.numpy as jnp
import numpy as np
from jax.experimental import pallas as pl
from jax.experimental.pallas import tpu as pltpu

SN = 32                     # Discriminator.start_number
MAX_BATCH_BLOCK = 32        # VMEM-safe batch block on all generations


# ----------------------------------------------------------------------------
# Pallas kernel: Discriminator forward for a block of BB batch elements.
# ----------------------------------------------------------------------------
def _discriminator_kernel(
    x_ref,        # (BB, N, C_in)                                    VMEM
    w1_ref,       # (C_in, 32)                                       VMEM
    w2_ref,       # (32, 64)                                         VMEM
    wk128_ref,    # (128, 768)  = [wf|pad, wg|pad, wh, w3, w4]        VMEM
    wk256_ref,    # (256, 384)  = [w5, w6|pad]                        VMEM
    b_ref,        # (9, 256)    rows: b1,b2,bf,bg,bh,b3,b4,b5,b6      VMEM
    gamma_ref,    # (1,)                                              SMEM
    out_ref,      # (BB, 1)
):
    f32 = jnp.float32
    BB, N, C_in = x_ref.shape
    M = BB * N

    x = x_ref[...].reshape(M, C_in)                                   # (M, C_in)

    # --- mlp_conv1: Conv1d(C_in->32)+ReLU, Conv1d(32->64) --------------------
    h1 = jnp.maximum(
        jnp.dot(x, w1_ref[...], preferred_element_type=f32) + b_ref[0:1, 0:SN],
        0.0)                                                          # (M, 32)
    feats = (jnp.dot(h1, w2_ref[...], preferred_element_type=f32)
             + b_ref[1:2, 0:2 * SN])                                  # (M, 64)

    # --- per-element global max over points, concat along channels -----------
    feats_b = feats.reshape(BB, N, 2 * SN)
    fg = jnp.max(feats_b, axis=1, keepdims=True)                      # (BB, 1, 64)
    feat_b = jnp.concatenate(
        [feats_b, jnp.broadcast_to(fg, feats_b.shape)], axis=-1)      # (BB, N, 128)
    feat = feat_b.reshape(M, 4 * SN)                                  # (M, 128)

    # --- attention_unit (batched over BB) -------------------------------------
    wf = wk128_ref[:, 0:SN]                  # 128-lane-aligned slices
    wg = wk128_ref[:, 128:128 + SN]
    wh = wk128_ref[:, 256:256 + 4 * SN]
    f = jnp.maximum(
        jnp.dot(feat, wf, preferred_element_type=f32) + b_ref[2:3, 0:SN], 0.0)
    g = jnp.maximum(
        jnp.dot(feat, wg, preferred_element_type=f32) + b_ref[3:4, 0:SN], 0.0)
    h = jnp.maximum(
        jnp.dot(feat, wh, preferred_element_type=f32) + b_ref[4:5, 0:4 * SN], 0.0)

    f3 = f.reshape(BB, N, SN)
    g3 = g.reshape(BB, N, SN)
    h3 = h.reshape(BB, N, 4 * SN)

    # s[b,i,j] = sum_c g[b,i,c] * f[b,j,c]   (torch: matmul(g^T, f) in NCW)
    s = jax.lax.dot_general(
        g3, f3, (((2,), (2,)), ((0,), (0,))), preferred_element_type=f32)  # (BB,N,N)
    s_max = jnp.max(s, axis=-1, keepdims=True)
    p = jnp.exp(s - s_max)
    beta = p * pl.reciprocal(jnp.sum(p, axis=-1, keepdims=True), approx=True)

    # o[b,j,c] = sum_i beta[b,i,j] * h[b,i,c]   (torch: matmul(h, beta) in NCW)
    o3 = jax.lax.dot_general(
        beta, h3, (((1,), (1,)), ((0,), (0,))), preferred_element_type=f32)  # (BB,N,128)
    o = o3.reshape(M, 4 * SN)

    att = gamma_ref[0] * o + feat                                     # (M, 128)

    # --- mlp_conv2: Conv1d(128->128)+ReLU, Conv1d(128->256) -------------------
    w3 = wk128_ref[:, 384:384 + 4 * SN]
    w4 = wk128_ref[:, 512:512 + 8 * SN]
    h2 = jnp.maximum(
        jnp.dot(att, w3, preferred_element_type=f32) + b_ref[5:6, 0:4 * SN], 0.0)
    f2 = jnp.dot(h2, w4, preferred_element_type=f32) + b_ref[6:7, 0:8 * SN]  # (M,256)

    # --- per-element global max over points, final MLP on (BB, 256) -----------
    fm = jnp.max(f2.reshape(BB, N, 8 * SN), axis=1)                   # (BB, 256)

    w5 = wk256_ref[:, 0:8 * SN]
    w6 = wk256_ref[:, 8 * SN:8 * SN + 1]
    m1 = jnp.maximum(
        jnp.dot(fm, w5, preferred_element_type=f32) + b_ref[7:8, 0:8 * SN], 0.0)
    out = jnp.dot(m1, w6, preferred_element_type=f32) + b_ref[8:9, 0:1]  # (BB, 1)

    out_ref[...] = out


# ----------------------------------------------------------------------------
# Parameter construction / packing.
# ----------------------------------------------------------------------------
def make_params(in_channels, key, gamma=0.1):
    """Deterministic synthetic parameters. Weights stored as (C_in, C_out).

    Note: PyTorch initializes gamma to 0; a small nonzero value is used here so
    the attention path is actually exercised by the correctness check.
    """
    dims = [
        ("w1", (in_channels, SN)), ("b1", (1, SN)),
        ("w2", (SN, 2 * SN)), ("b2", (1, 2 * SN)),
        ("wf", (4 * SN, SN)), ("bf", (1, SN)),
        ("wg", (4 * SN, SN)), ("bg", (1, SN)),
        ("wh", (4 * SN, 4 * SN)), ("bh", (1, 4 * SN)),
        ("w3", (4 * SN, 4 * SN)), ("b3", (1, 4 * SN)),
        ("w4", (4 * SN, 8 * SN)), ("b4", (1, 8 * SN)),
        ("w5", (8 * SN, 8 * SN)), ("b5", (1, 8 * SN)),
        ("w6", (8 * SN, 1)), ("b6", (1, 1)),
    ]
    params = {}
    keys = jax.random.split(key, len(dims))
    for (name, shape), k in zip(dims, keys):
        scale = 0.1 if name.startswith("w") else 0.01
        params[name] = scale * jax.random.normal(k, shape, dtype=jnp.float32)
    params["gamma"] = jnp.full((1,), gamma, dtype=jnp.float32)
    return params


def _pad_lanes(a, width):
    return jnp.pad(a, ((0, 0), (0, width - a.shape[1])))


def _pack_params(p):
    """Pack 19 small tensors into 5 arrays with 128-aligned segments + gamma."""
    wk128 = jnp.concatenate(
        [_pad_lanes(p["wf"], 128), _pad_lanes(p["wg"], 128),
         p["wh"], p["w3"], p["w4"]], axis=1)                     # (128, 768)
    wk256 = jnp.concatenate(
        [p["w5"], _pad_lanes(p["w6"], 128)], axis=1)             # (256, 384)
    biases = jnp.concatenate(
        [_pad_lanes(p[k], 8 * SN) for k in
         ("b1", "b2", "bf", "bg", "bh", "b3", "b4", "b5", "b6")], axis=0)  # (9, 256)
    gamma = p["gamma"].reshape(1).astype(jnp.float32)
    return p["w1"], p["w2"], wk128, wk256, biases, gamma


# ----------------------------------------------------------------------------
# Wrapper: pallas_call plumbing with batch blocking.
# ----------------------------------------------------------------------------
@functools.partial(jax.jit, static_argnames=("block_b",))
def discriminator_pallas(x_ncw, params, block_b=MAX_BATCH_BLOCK):
    """x_ncw: (B, C_in, N) float32 (PyTorch Conv1d layout). Returns (B, 1)."""
    # TODO(synk): C_in=3 transpose stays in XLA (tiny); in-kernel it would need
    # an odd-shaped relayout for no measurable gain at these sizes.
    x = jnp.transpose(x_ncw, (0, 2, 1)).astype(jnp.float32)      # (B, N, C_in)
    B, N, C_in = x.shape

    BB = min(B, block_b)
    n_blocks = pl.cdiv(B, BB)
    Bp = n_blocks * BB
    if Bp != B:
        x = jnp.pad(x, ((0, Bp - B), (0, 0), (0, 0)))

    w1, w2, wk128, wk256, biases, gamma = _pack_params(params)

    in_specs = [
        pl.BlockSpec((BB, N, C_in), lambda b: (b, 0, 0)),
        pl.BlockSpec((C_in, SN), lambda b: (0, 0)),
        pl.BlockSpec((SN, 2 * SN), lambda b: (0, 0)),
        pl.BlockSpec((4 * SN, 768), lambda b: (0, 0)),
        pl.BlockSpec((8 * SN, 384), lambda b: (0, 0)),
        pl.BlockSpec((9, 8 * SN), lambda b: (0, 0)),
        pl.BlockSpec(memory_space=pltpu.MemorySpace.SMEM),        # gamma scalar
    ]

    out = pl.pallas_call(
        _discriminator_kernel,
        out_shape=jax.ShapeDtypeStruct((Bp, 1), jnp.float32),
        grid_spec=pltpu.PrefetchScalarGridSpec(
            num_scalar_prefetch=0,
            grid=(n_blocks,),
            in_specs=in_specs,
            out_specs=pl.BlockSpec((BB, 1), lambda b: (b, 0)),
        ),
        compiler_params=pltpu.CompilerParams(
            dimension_semantics=("parallel",),
            vmem_limit_bytes=48 * 1024 * 1024,
        ),
    )(x, w1, w2, wk128, wk256, biases, gamma)

    return out[:B]


# ----------------------------------------------------------------------------
# Pure-JAX reference (same math, channels-last) for correctness checking.
# ----------------------------------------------------------------------------
def discriminator_ref(x_ncw, p):
    x = jnp.transpose(x_ncw, (0, 2, 1)).astype(jnp.float32)          # (B, N, C)
    relu = jax.nn.relu
    h1 = relu(x @ p["w1"] + p["b1"])
    feats = h1 @ p["w2"] + p["b2"]                                    # (B, N, 64)
    fg = jnp.max(feats, axis=1, keepdims=True)                        # (B, 1, 64)
    feat = jnp.concatenate(
        [feats, jnp.broadcast_to(fg, feats.shape)], axis=-1)          # (B, N, 128)
    f = relu(feat @ p["wf"] + p["bf"])
    g = relu(feat @ p["wg"] + p["bg"])
    h = relu(feat @ p["wh"] + p["bh"])
    s = jnp.einsum("bic,bjc->bij", g, f)                              # (B, N, N)
    beta = jax.nn.softmax(s, axis=-1)
    o = jnp.einsum("bij,bic->bjc", beta, h)                           # (B, N, 128)
    att = p["gamma"][0] * o + feat
    h2 = relu(att @ p["w3"] + p["b3"])
    f2 = h2 @ p["w4"] + p["b4"]                                       # (B, N, 256)
    fm = jnp.max(f2, axis=1)                                          # (B, 256)
    m1 = relu(fm @ p["w5"] + p["b5"])
    return m1 @ p["w6"] + p["b6"]                                     # (B, 1)


# ----------------------------------------------------------------------------
if __name__ == "__main__":
    key = jax.random.PRNGKey(0)
    k_x, k_p = jax.random.split(key)

    B, C_in, N = 2, 3, 64          # point cloud: 3 input channels, 64 points
    x = jax.random.normal(k_x, (B, C_in, N), dtype=jnp.float32)
    params = make_params(C_in, k_p)

    out = jax.block_until_ready(discriminator_pallas(x, params))
    ref = discriminator_ref(x, params)

    # Tolerance accounts for the EUP approximate reciprocal in the softmax.
    np.testing.assert_allclose(np.asarray(out), np.asarray(ref),
                               rtol=1e-3, atol=1e-3)
    assert out.shape == (B, 1)
    print("KERNEL_OK")
</pallas_src>

<mosaic_0001>
module attributes {stable_mosaic.version = 11 : i64} {
  func.func @_discriminator_kernel(%arg0: i32, %arg1: memref<2x64x3xf32, #tpu.memory_space<vmem>>, %arg2: memref<3x32xf32, #tpu.memory_space<vmem>>, %arg3: memref<32x64xf32, #tpu.memory_space<vmem>>, %arg4: memref<128x768xf32, #tpu.memory_space<vmem>>, %arg5: memref<256x384xf32, #tpu.memory_space<vmem>>, %arg6: memref<9x256xf32, #tpu.memory_space<vmem>>, %arg7: memref<1xf32, #tpu.memory_space<smem>>, %arg8: memref<2x1xf32, #tpu.memory_space<vmem>>) attributes {dimension_semantics = [#tpu.dimension_semantics<parallel>], iteration_bounds = array<i64: 1>, scalar_prefetch = 0 : i64, scratch_operands = 0 : i64, tpu.core_type = #tpu.core_type<tc>, window_params = [{transform_indices = @transform_0, window_bounds = array<i64: 2, 64, 3>}, {pipeline_mode = #tpu.pipeline_mode<synchronous>, transform_indices = @transform_1, window_bounds = array<i64: 3, 32>}, {pipeline_mode = #tpu.pipeline_mode<synchronous>, transform_indices = @transform_2, window_bounds = array<i64: 32, 64>}, {pipeline_mode = #tpu.pipeline_mode<synchronous>, transform_indices = @transform_3, window_bounds = array<i64: 128, 768>}, {pipeline_mode = #tpu.pipeline_mode<synchronous>, transform_indices = @transform_4, window_bounds = array<i64: 256, 384>}, {pipeline_mode = #tpu.pipeline_mode<synchronous>, transform_indices = @transform_5, window_bounds = array<i64: 9, 256>}, {transform_indices = @transform_6, window_bounds = array<i64: 1>}, {transform_indices = @transform_7, window_bounds = array<i64: 2, 1>}]} {
    %c0 = arith.constant 0 : index
    %c0_0 = arith.constant 0 : index
    %c0_1 = arith.constant 0 : index
    %0 = vector.load %arg1[%c0, %c0_0, %c0_1] : memref<2x64x3xf32, #tpu.memory_space<vmem>>, vector<2x64x3xf32>
    %1 = vector.shape_cast %0 : vector<2x64x3xf32> to vector<128x3xf32>
    %c0_2 = arith.constant 0 : index
    %c0_3 = arith.constant 0 : index
    %2 = vector.load %arg2[%c0_2, %c0_3] : memref<3x32xf32, #tpu.memory_space<vmem>>, vector<3x32xf32>
    %cst = arith.constant dense<0.000000e+00> : vector<128x32xf32>
    %3 = tpu.matmul %1, %2, %cst {dimension_numbers = #tpu.dot_dimension_numbers<[1], [0], [0], [1], [0, 0, 1, 1], [], []>} : vector<128x3xf32>, vector<3x32xf32>, vector<128x32xf32> -> vector<128x32xf32>
    %c0_4 = arith.constant 0 : index
    %c0_5 = arith.constant 0 : index
    %4 = vector.load %arg6[%c0_4, %c0_5] : memref<9x256xf32, #tpu.memory_space<vmem>>, vector<1x32xf32>
    %5 = vector.broadcast %4 : vector<1x32xf32> to vector<128x32xf32>
    %6 = arith.addf %3, %5 : vector<128x32xf32>
    %cst_6 = arith.constant 0.000000e+00 : f32
    %7 = vector.broadcast %cst_6 : f32 to vector<128x32xf32>
    %8 = arith.maximumf %6, %7 : vector<128x32xf32>
    %c0_7 = arith.constant 0 : index
    %c0_8 = arith.constant 0 : index
    %9 = vector.load %arg3[%c0_7, %c0_8] : memref<32x64xf32, #tpu.memory_space<vmem>>, vector<32x64xf32>
    %cst_9 = arith.constant dense<0.000000e+00> : vector<128x64xf32>
    %10 = tpu.matmul %8, %9, %cst_9 {dimension_numbers = #tpu.dot_dimension_numbers<[1], [0], [0], [1], [0, 0, 1, 1], [], []>} : vector<128x32xf32>, vector<32x64xf32>, vector<128x64xf32> -> vector<128x64xf32>
    %c1 = arith.constant 1 : index
    %c0_10 = arith.constant 0 : index
    %11 = vector.load %arg6[%c1, %c0_10] : memref<9x256xf32, #tpu.memory_space<vmem>>, vector<1x64xf32>
    %12 = vector.broadcast %11 : vector<1x64xf32> to vector<128x64xf32>
    %13 = arith.addf %10, %12 : vector<128x64xf32>
    %14 = vector.shape_cast %13 : vector<128x64xf32> to vector<2x64x64xf32>
    %cst_11 = arith.constant dense<0xFF800000> : vector<2x64xf32>
    %15 = vector.multi_reduction <maximumf>, %14, %cst_11 [1] : vector<2x64x64xf32> to vector<2x64xf32>
    %16 = vector.shape_cast %15 : vector<2x64xf32> to vector<2x1x64xf32>
    %17 = vector.shape_cast %16 : vector<2x1x64xf32> to vector<2x1x64xf32>
    %18 = vector.broadcast %17 : vector<2x1x64xf32> to vector<2x64x64xf32>
    %19 = tpu.concatenate %14, %18 in 2 : vector<2x64x64xf32>, vector<2x64x64xf32> -> vector<2x64x128xf32>
    %20 = vector.shape_cast %19 : vector<2x64x128xf32> to vector<128x128xf32>
    %c0_12 = arith.constant 0 : index
    %c0_13 = arith.constant 0 : index
    %21 = vector.load %arg4[%c0_12, %c0_13] : memref<128x768xf32, #tpu.memory_space<vmem>>, vector<128x32xf32>
    %c0_14 = arith.constant 0 : index
    %c128 = arith.constant 128 : index
    %22 = vector.load %arg4[%c0_14, %c128] : memref<128x768xf32, #tpu.memory_space<vmem>>, vector<128x32xf32>
    %c0_15 = arith.constant 0 : index
    %c256 = arith.constant 256 : index
    %23 = vector.load %arg4[%c0_15, %c256] : memref<128x768xf32, #tpu.memory_space<vmem>>, vector<128x128xf32>
    %cst_16 = arith.constant dense<0.000000e+00> : vector<128x32xf32>
    %24 = tpu.matmul %20, %21, %cst_16 {dimension_numbers = #tpu.dot_dimension_numbers<[1], [0], [0], [1], [0, 0, 1, 1], [], []>} : vector<128x128xf32>, vector<128x32xf32>, vector<128x32xf32> -> vector<128x32xf32>
    %c2 = arith.constant 2 : index
    %c0_17 = arith.constant 0 : index
    %25 = vector.load %arg6[%c2, %c0_17] : memref<9x256xf32, #tpu.memory_space<vmem>>, vector<1x32xf32>
    %26 = vector.broadcast %25 : vector<1x32xf32> to vector<128x32xf32>
    %27 = arith.addf %24, %26 : vector<128x32xf32>
    %cst_18 = arith.constant 0.000000e+00 : f32
    %28 = vector.broadcast %cst_18 : f32 to vector<128x32xf32>
    %29 = arith.maximumf %27, %28 : vector<128x32xf32>
    %cst_19 = arith.constant dense<0.000000e+00> : vector<128x32xf32>
    %30 = tpu.matmul %20, %22, %cst_19 {dimension_numbers = #tpu.dot_dimension_numbers<[1], [0], [0], [1], [0, 0, 1, 1], [], []>} : vector<128x128xf32>, vector<128x32xf32>, vector<128x32xf32> -> vector<128x32xf32>
    %c3 = arith.constant 3 : index
    %c0_20 = arith.constant 0 : index
    %31 = vector.load %arg6[%c3, %c0_20] : memref<9x256xf32, #tpu.memory_space<vmem>>, vector<1x32xf32>
    %32 = vector.broadcast %31 : vector<1x32xf32> to vector<128x32xf32>
    %33 = arith.addf %30, %32 : vector<128x32xf32>
    %cst_21 = arith.constant 0.000000e+00 : f32
    %34 = vector.broadcast %cst_21 : f32 to vector<128x32xf32>
    %35 = arith.maximumf %33, %34 : vector<128x32xf32>
    %cst_22 = arith.constant dense<0.000000e+00> : vector<128x128xf32>
    %36 = tpu.matmul %20, %23, %cst_22 {dimension_numbers = #tpu.dot_dimension_numbers<[1], [0], [0], [1], [0, 0, 1, 1], [], []>} : vector<128x128xf32>, vector<128x128xf32>, vector<128x128xf32> -> vector<128x128xf32>
    %c4 = arith.constant 4 : index
    %c0_23 = arith.constant 0 : index
    %37 = vector.load %arg6[%c4, %c0_23] : memref<9x256xf32, #tpu.memory_space<vmem>>, vector<1x128xf32>
    %38 = vector.broadcast %37 : vector<1x128xf32> to vector<128x128xf32>
    %39 = arith.addf %36, %38 : vector<128x128xf32>
    %cst_24 = arith.constant 0.000000e+00 : f32
    %40 = vector.broadcast %cst_24 : f32 to vector<128x128xf32>
    %41 = arith.maximumf %39, %40 : vector<128x128xf32>
    %42 = vector.shape_cast %29 : vector<128x32xf32> to vector<2x64x32xf32>
    %43 = vector.shape_cast %35 : vector<128x32xf32> to vector<2x64x32xf32>
    %44 = vector.shape_cast %41 : vector<128x128xf32> to vector<2x64x128xf32>
    %cst_25 = arith.constant dense<0.000000e+00> : vector<2x64x64xf32>
    %45 = tpu.matmul %43, %42, %cst_25 {dimension_numbers = #tpu.dot_dimension_numbers<[2], [2], [1], [1], [0, 0, 0, 1, 1, 1], [0], [0]>} : vector<2x64x32xf32>, vector<2x64x32xf32>, vector<2x64x64xf32> -> vector<2x64x64xf32>
    %cst_26 = arith.constant dense<0xFF800000> : vector<2x64xf32>
    %46 = vector.multi_reduction <maximumf>, %45, %cst_26 [2] : vector<2x64x64xf32> to vector<2x64xf32>
    %47 = vector.shape_cast %46 : vector<2x64xf32> to vector<2x64x1xf32>
    %48 = vector.broadcast %47 : vector<2x64x1xf32> to vector<2x64x64xf32>
    %49 = arith.subf %45, %48 : vector<2x64x64xf32>
    %50 = math.exp %49 : vector<2x64x64xf32>
    %cst_27 = arith.constant dense<0.000000e+00> : vector<2x64xf32>
    %51 = vector.multi_reduction <add>, %50, %cst_27 [2] : vector<2x64x64xf32> to vector<2x64xf32>
    %52 = vector.shape_cast %51 : vector<2x64xf32> to vector<2x64x1xf32>
    %53 = tpu.reciprocal %52 {approx = true} : vector<2x64x1xf32> -> vector<2x64x1xf32>
    %54 = vector.broadcast %53 : vector<2x64x1xf32> to vector<2x64x64xf32>
    %55 = arith.mulf %50, %54 : vector<2x64x64xf32>
    %cst_28 = arith.constant dense<0.000000e+00> : vector<2x64x128xf32>
    %56 = tpu.matmul %55, %44, %cst_28 {dimension_numbers = #tpu.dot_dimension_numbers<[1], [1], [2], [2], [0, 0, 0, 2, 1, 2], [0], [0]>} : vector<2x64x64xf32>, vector<2x64x128xf32>, vector<2x64x128xf32> -> vector<2x64x128xf32>
    %57 = vector.shape_cast %56 : vector<2x64x128xf32> to vector<128x128xf32>
    %c0_29 = arith.constant 0 : index
    %58 = memref.load %arg7[%c0_29] : memref<1xf32, #tpu.memory_space<smem>>
    %59 = vector.broadcast %58 : f32 to vector<128x128xf32>
    %60 = arith.mulf %59, %57 : vector<128x128xf32>
    %61 = arith.addf %60, %20 : vector<128x128xf32>
    %c0_30 = arith.constant 0 : index
    %c384 = arith.constant 384 : index
    %62 = vector.load %arg4[%c0_30, %c384] : memref<128x768xf32, #tpu.memory_space<vmem>>, vector<128x128xf32>
    %c0_31 = arith.constant 0 : index
    %c512 = arith.constant 512 : index
    %63 = vector.load %arg4[%c0_31, %c512] : memref<128x768xf32, #tpu.memory_space<vmem>>, vector<128x256xf32>
    %cst_32 = arith.constant dense<0.000000e+00> : vector<128x128xf32>
    %64 = tpu.matmul %61, %62, %cst_32 {dimension_numbers = #tpu.dot_dimension_numbers<[1], [0], [0], [1], [0, 0, 1, 1], [], []>} : vector<128x128xf32>, vector<128x128xf32>, vector<128x128xf32> -> vector<128x128xf32>
    %c5 = arith.constant 5 : index
    %c0_33 = arith.constant 0 : index
    %65 = vector.load %arg6[%c5, %c0_33] : memref<9x256xf32, #tpu.memory_space<vmem>>, vector<1x128xf32>
    %66 = vector.broadcast %65 : vector<1x128xf32> to vector<128x128xf32>
    %67 = arith.addf %64, %66 : vector<128x128xf32>
    %cst_34 = arith.constant 0.000000e+00 : f32
    %68 = vector.broadcast %cst_34 : f32 to vector<128x128xf32>
    %69 = arith.maximumf %67, %68 : vector<128x128xf32>
    %cst_35 = arith.constant dense<0.000000e+00> : vector<128x256xf32>
    %70 = tpu.matmul %69, %63, %cst_35 {dimension_numbers = #tpu.dot_dimension_numbers<[1], [0], [0], [1], [0, 0, 1, 1], [], []>} : vector<128x128xf32>, vector<128x256xf32>, vector<128x256xf32> -> vector<128x256xf32>
    %c6 = arith.constant 6 : index
    %c0_36 = arith.constant 0 : index
    %71 = vector.load %arg6[%c6, %c0_36] : memref<9x256xf32, #tpu.memory_space<vmem>>, vector<1x256xf32>
    %72 = vector.broadcast %71 : vector<1x256xf32> to vector<128x256xf32>
    %73 = arith.addf %70, %72 : vector<128x256xf32>
    %74 = vector.shape_cast %73 : vector<128x256xf32> to vector<2x64x256xf32>
    %cst_37 = arith.constant dense<0xFF800000> : vector<2x256xf32>
    %75 = vector.multi_reduction <maximumf>, %74, %cst_37 [1] : vector<2x64x256xf32> to vector<2x256xf32>
    %c0_38 = arith.constant 0 : index
    %c0_39 = arith.constant 0 : index
    %76 = vector.load %arg5[%c0_38, %c0_39] : memref<256x384xf32, #tpu.memory_space<vmem>>, vector<256x256xf32>
    %c0_40 = arith.constant 0 : index
    %c256_41 = arith.constant 256 : index
    %77 = vector.load %arg5[%c0_40, %c256_41] : memref<256x384xf32, #tpu.memory_space<vmem>>, vector<256x1xf32>
    %cst_42 = arith.constant dense<0.000000e+00> : vector<2x256xf32>
    %78 = tpu.matmul %75, %76, %cst_42 {dimension_numbers = #tpu.dot_dimension_numbers<[1], [0], [0], [1], [0, 0, 1, 1], [], []>} : vector<2x256xf32>, vector<256x256xf32>, vector<2x256xf32> -> vector<2x256xf32>
    %c7 = arith.constant 7 : index
    %c0_43 = arith.constant 0 : index
    %79 = vector.load %arg6[%c7, %c0_43] : memref<9x256xf32, #tpu.memory_space<vmem>>, vector<1x256xf32>
    %80 = vector.broadcast %79 : vector<1x256xf32> to vector<2x256xf32>
    %81 = arith.addf %78, %80 : vector<2x256xf32>
    %cst_44 = arith.constant 0.000000e+00 : f32
    %82 = vector.broadcast %cst_44 : f32 to vector<2x256xf32>
    %83 = arith.maximumf %81, %82 : vector<2x256xf32>
    %cst_45 = arith.constant dense<0.000000e+00> : vector<2x1xf32>
    %84 = tpu.matmul %83, %77, %cst_45 {dimension_numbers = #tpu.dot_dimension_numbers<[1], [0], [0], [1], [0, 0, 1, 1], [], []>} : vector<2x256xf32>, vector<256x1xf32>, vector<2x1xf32> -> vector<2x1xf32>
    %c8 = arith.constant 8 : index
    %c0_46 = arith.constant 0 : index
    %85 = vector.load %arg6[%c8, %c0_46] : memref<9x256xf32, #tpu.memory_space<vmem>>, vector<1x1xf32>
    %86 = vector.broadcast %85 : vector<1x1xf32> to vector<2x1xf32>
    %87 = arith.addf %84, %86 : vector<2x1xf32>
    %c0_47 = arith.constant 0 : index
    %c0_48 = arith.constant 0 : index
    %88 = vector.load %arg8[%c0_47, %c0_48] : memref<2x1xf32, #tpu.memory_space<vmem>>, vector<2x1xf32>
    tpu.vector_store %arg8[%c0_47, %c0_48], %87 {strides = array<i32>} : memref<2x1xf32, #tpu.memory_space<vmem>>, vector<2x1xf32>,
    return
  }
  func.func @transform_0(%arg0: i32) -> (i32, i32, i32) {
    %c0_i32 = arith.constant 0 : i32
    %c0_i32_0 = arith.constant 0 : i32
    %c0_i32_1 = arith.constant 0 : i32
    return %arg0, %c0_i32, %c0_i32_0 : i32, i32, i32
  }
  func.func @transform_1(%arg0: i32) -> (i32, i32) {
    %c0_i32 = arith.constant 0 : i32
    %c0_i32_0 = arith.constant 0 : i32
    %c0_i32_1 = arith.constant 0 : i32
    return %c0_i32, %c0_i32_0 : i32, i32
  }
  func.func @transform_2(%arg0: i32) -> (i32, i32) {
    %c0_i32 = arith.constant 0 : i32
    %c0_i32_0 = arith.constant 0 : i32
    %c0_i32_1 = arith.constant 0 : i32
    return %c0_i32, %c0_i32_0 : i32, i32
  }
  func.func @transform_3(%arg0: i32) -> (i32, i32) {
    %c0_i32 = arith.constant 0 : i32
    %c0_i32_0 = arith.constant 0 : i32
    %c0_i32_1 = arith.constant 0 : i32
    return %c0_i32, %c0_i32_0 : i32, i32
  }
  func.func @transform_4(%arg0: i32) -> (i32, i32) {
    %c0_i32 = arith.constant 0 : i32
    %c0_i32_0 = arith.constant 0 : i32
    %c0_i32_1 = arith.constant 0 : i32
    return %c0_i32, %c0_i32_0 : i32, i32
  }
  func.func @transform_5(%arg0: i32) -> (i32, i32) {
    %c0_i32 = arith.constant 0 : i32
    %c0_i32_0 = arith.constant 0 : i32
    %c0_i32_1 = arith.constant 0 : i32
    return %c0_i32, %c0_i32_0 : i32, i32
  }
  func.func @transform_6(%arg0: i32) -> i32 {
    %c0_i32 = arith.constant 0 : i32
    %c0_i32_0 = arith.constant 0 : i32
    return %c0_i32 : i32
  }
  func.func @transform_7(%arg0: i32) -> (i32, i32) {
    %c0_i32 = arith.constant 0 : i32
    %c0_i32_0 = arith.constant 0 : i32
    return %arg0, %c0_i32 : i32, i32
  }
}

</mosaic_0001>

<llo_original>
// kernel: discriminator_pallas.1
$region0: #{discriminator_pallas.1}
  #allocation0 [shape = 'u32[]', space=smem, size = 0x4, offset = 0x4, fixed_abs, tag = 'smem constant byte address 0x4 - core index']
  #allocation1 [shape = 'u32[72,128]{1,0:T(1,128)}', space=vmem, size = 0x9000, scoped, tag = 'internal scratch']
  #allocation2 [shape = 'f32[1]{0:T(128)S(6)}', space=smem, size = 0x200, scoped, tag = 'scoped memory for discriminator_pallas.1']
  %s0 = inlined_call_operand.vmem [shape: f32[2,64,3], index: 0, kind: input, shape index: {}]
  %s1 = inlined_call_operand.vmem [shape: f32[3,32], index: 1, kind: input, shape index: {}]
  %s2 = inlined_call_operand.vmem [shape: f32[32,64], index: 2, kind: input, shape index: {}]
  %s3 = inlined_call_operand.vmem [shape: f32[128,768], index: 3, kind: input, shape index: {}]
  %s4 = inlined_call_operand.vmem [shape: f32[256,384], index: 4, kind: input, shape index: {}]
  %s5 = inlined_call_operand.vmem [shape: f32[9,256], index: 5, kind: input, shape index: {}]
  %s6 = inlined_call_operand.<no memory space> [shape: f32[1], index: 6, kind: input, shape index: {}]
  %s7 = inlined_call_operand.vmem [shape: f32[2,1], index: 7, kind: output, shape index: {}]
  %s8 = sld [smem:[#allocation0]]
  $region38: #{discriminator_pallas.1} parent=0
    _
  %s10 = ssub.s32 1, %s8
  %s11 = scalar_select 0, %s10, %s8
  %12 = sst [smem:[#allocation2]] %s6
  // Predicated region
  $region2: #{discriminator_pallas.1} parent=0 // pred_check
    _
  $region3: #{discriminator_pallas.1} parent=0 // pred_check_branch
    %14 = sbr.rel (0) target = $region5
  $region4: #{discriminator_pallas.1} parent=0 // pred_region
    _
  $region5: #{discriminator_pallas.1} parent=0 // pred_fallthru
    _
  // Predicated region
  $region6: #{discriminator_pallas.1} parent=0 // pred_check
    _
  $region7: #{discriminator_pallas.1} parent=0 // pred_check_branch
    %16 = sbr.rel (0) target = $region9
  $region8: #{discriminator_pallas.1} parent=0 // pred_region
    _
  $region9: #{discriminator_pallas.1} parent=0 // pred_fallthru
    _
  // Predicated region
  $region10: #{discriminator_pallas.1} parent=0 // pred_check
    _
  $region11: #{discriminator_pallas.1} parent=0 // pred_check_branch
    %18 = sbr.rel (0) target = $region13
  $region12: #{discriminator_pallas.1} parent=0 // pred_region
    _
  $region13: #{discriminator_pallas.1} parent=0 // pred_fallthru
    _
  // Predicated region
  $region14: #{discriminator_pallas.1} parent=0 // pred_check
    _
  $region15: #{discriminator_pallas.1} parent=0 // pred_check_branch
    %20 = sbr.rel (0) target = $region17
  $region16: #{discriminator_pallas.1} parent=0 // pred_region
    _
  $region17: #{discriminator_pallas.1} parent=0 // pred_fallthru
    _
  // Predicated region
  $region18: #{discriminator_pallas.1} parent=0 // pred_check
    _
  $region19: #{discriminator_pallas.1} parent=0 // pred_check_branch
    %22 = sbr.rel (0) target = $region21
  $region20: #{discriminator_pallas.1} parent=0 // pred_region
    _
  $region21: #{discriminator_pallas.1} parent=0 // pred_fallthru
    _
  // Predicated region
  $region22: #{discriminator_pallas.1} parent=0 // pred_check
    _
  $region23: #{discriminator_pallas.1} parent=0 // pred_check_branch
    %24 = sbr.rel (0) target = $region25
  $region24: #{discriminator_pallas.1} parent=0 // pred_region
    _
  $region25: #{discriminator_pallas.1} parent=0 // pred_fallthru
    _
  // Predicated region
  $region26: #{discriminator_pallas.1} parent=0 // pred_check
    _
  $region27: #{discriminator_pallas.1} parent=0 // pred_check_branch
    %26 = sbr.rel (0) target = $region29
  $region28: #{discriminator_pallas.1} parent=0 // pred_region
    _
  $region29: #{discriminator_pallas.1} parent=0 // pred_fallthru
    _
  %v27 = vld [vmem:[%s0] sm:$0xff]
  %v28 = vld [vmem:[%s0 + $0x8] sm:$0xff]
  %v29 = vld [vmem:[%s0 + $0x10] sm:$0xff]
  %v30 = vld [vmem:[%s0 + $0x18] sm:$0xff]
  %v31 = vld [vmem:[%s0 + $0x20] sm:$0xff]
  %v32 = vld [vmem:[%s0 + $0x28] sm:$0xff]
  %v33 = vld [vmem:[%s0 + $0x30] sm:$0xff]
  %v34 = vld [vmem:[%s0 + $0x38] sm:$0xff]
  %v35 = vld [vmem:[%s0 + $0x40] sm:$0xff]
  %v36 = vld [vmem:[%s0 + $0x48] sm:$0xff]
  %v37 = vld [vmem:[%s0 + $0x50] sm:$0xff]
  %v38 = vld [vmem:[%s0 + $0x58] sm:$0xff]
  %v39 = vld [vmem:[%s0 + $0x60] sm:$0xff]
  %v40 = vld [vmem:[%s0 + $0x68] sm:$0xff]
  %v41 = vld [vmem:[%s0 + $0x70] sm:$0xff]
  %v42 = vld [vmem:[%s0 + $0x78] sm:$0xff]
  %v43 = vld [vmem:[%s1] sm:$0x7]
  %v44 = vld [vmem:[%s5] ss:$0 sm:$0xff]
  %vm45 = vcmask 23552
  %v47 = vsel %vm45, %v27, 0
  %v50 = vsel %vm45, %v28, 0
  %v53 = vsel %vm45, %v29, 0
  %v56 = vsel %vm45, %v30, 0
  %v59 = vsel %vm45, %v31, 0
  %v62 = vsel %vm45, %v32, 0
  %v65 = vsel %vm45, %v33, 0
  %v68 = vsel %vm45, %v34, 0
  %v71 = vsel %vm45, %v35, 0
  %v74 = vsel %vm45, %v36, 0
  %v77 = vsel %vm45, %v37, 0
  %v80 = vsel %vm45, %v38, 0
  %v83 = vsel %vm45, %v39, 0
  %v86 = vsel %vm45, %v40, 0
  %v89 = vsel %vm45, %v41, 0
  %v92 = vsel %vm45, %v42, 0
  %vm94 = vcmask 1042432
  %v96 = vsel %vm94, %v43, 0
  %98 = vmatpush.msra.mxu0 0.0
  %99 = vmatpush.msra.mxu0 0.0
  %100 = vmatpush.msra.mxu0 0.0
  %101 = vmatpush.msra.mxu0 0.0
  %102 = vmatpush.msra.mxu0 0.0
  %103 = vmatpush.msra.mxu0 0.0
  %104 = vmatpush.msra.mxu0 0.0
  %105 = vmatpush.msra.mxu0 0.0
  %106 = vmatpush.msra.mxu0 0.0
  %107 = vmatpush.msra.mxu0 0.0
  %108 = vmatpush.msra.mxu0 0.0
  %109 = vmatpush.msra.mxu0 0.0
  %110 = vmatpush.msra.mxu0 0.0
  %111 = vmatpush.msra.mxu0 0.0
  %112 = vmatpush.msra.mxu0 0.0
  %113 = vmatpush.msra.mxu0 %v96
  %114 = vmatmul.f32.gmra.mxu0 %v47
  %v115 = vpop.f32.mrf.mxu0
  %v116 = vadd.f32 %v44, %v115
  %117 = vmatmul.f32.gmra.mxu0 %v50
  %v118 = vpop.f32.mrf.mxu0
  %v119 = vadd.f32 %v44, %v118
  %120 = vmatmul.f32.gmra.mxu0 %v53
  %v121 = vpop.f32.mrf.mxu0
  %v122 = vadd.f32 %v44, %v121
  %123 = vmatmul.f32.gmra.mxu0 %v56
  %v124 = vpop.f32.mrf.mxu0
  %v125 = vadd.f32 %v44, %v124
  %126 = vmatmul.f32.gmra.mxu0 %v59
  %v127 = vpop.f32.mrf.mxu0
  %v128 = vadd.f32 %v44, %v127
  %129 = vmatmul.f32.gmra.mxu0 %v62
  %v130 = vpop.f32.mrf.mxu0
  %v131 = vadd.f32 %v44, %v130
  %132 = vmatmul.f32.gmra.mxu0 %v65
  %v133 = vpop.f32.mrf.mxu0
  %v134 = vadd.f32 %v44, %v133
  %135 = vmatmul.f32.gmra.mxu0 %v68
  %v136 = vpop.f32.mrf.mxu0
  %v137 = vadd.f32 %v44, %v136
  %138 = vmatmul.f32.gmra.mxu0 %v71
  %v139 = vpop.f32.mrf.mxu0
  %v140 = vadd.f32 %v44, %v139
  %141 = vmatmul.f32.gmra.mxu0 %v74
  %v142 = vpop.f32.mrf.mxu0
  %v143 = vadd.f32 %v44, %v142
  %144 = vmatmul.f32.gmra.mxu0 %v77
  %v145 = vpop.f32.mrf.mxu0
  %v146 = vadd.f32 %v44, %v145
  %147 = vmatmul.f32.gmra.mxu0 %v80
  %v148 = vpop.f32.mrf.mxu0
  %v149 = vadd.f32 %v44, %v148
  %150 = vmatmul.f32.gmra.mxu0 %v83
  %v151 = vpop.f32.mrf.mxu0
  %v152 = vadd.f32 %v44, %v151
  %153 = vmatmul.f32.gmra.mxu0 %v86
  %v154 = vpop.f32.mrf.mxu0
  %v155 = vadd.f32 %v44, %v154
  %156 = vmatmul.f32.gmra.mxu0 %v89
  %v157 = vpop.f32.mrf.mxu0
  %v158 = vadd.f32 %v44, %v157
  %159 = vmatmul.f32.gmra.mxu0 %v92
  %v160 = vpop.f32.mrf.mxu0
  %v161 = vadd.f32 %v44, %v160
  %162 = vdwg.mxu0
  %v163 = vmax.f32 %v116, 0.0
  %v164 = vmax.f32 %v119, 0.0
  %v165 = vmax.f32 %v122, 0.0
  %v166 = vmax.f32 %v125, 0.0
  %v167 = vmax.f32 %v128, 0.0
  %v168 = vmax.f32 %v131, 0.0
  %v169 = vmax.f32 %v134, 0.0
  %v170 = vmax.f32 %v137, 0.0
  %v171 = vmax.f32 %v140, 0.0
  %v172 = vmax.f32 %v143, 0.0
  %v173 = vmax.f32 %v146, 0.0
  %v174 = vmax.f32 %v149, 0.0
  %v175 = vmax.f32 %v152, 0.0
  %v176 = vmax.f32 %v155, 0.0
  %v177 = vmax.f32 %v158, 0.0
  %v178 = vmax.f32 %v161, 0.0
  %v179 = vld [vmem:[%s2] sm:$0xff]
  %v180 = vld [vmem:[%s2 + $0x8] sm:$0xff]
  %v181 = vld [vmem:[%s2 + $0x10] sm:$0xff]
  %v182 = vld [vmem:[%s2 + $0x18] sm:$0xff]
  %v183 = vld [vmem:[%s5 + $0x1] ss:$0 sm:$0xff]
  %vm184 = vcmask 261120
  %v186 = vsel %vm184, %v163, 0
  %v189 = vsel %vm184, %v164, 0
  %v192 = vsel %vm184, %v165, 0
  %v195 = vsel %vm184, %v166, 0
  %v198 = vsel %vm184, %v167, 0
  %v201 = vsel %vm184, %v168, 0
  %v204 = vsel %vm184, %v169, 0
  %v207 = vsel %vm184, %v170, 0
  %v210 = vsel %vm184, %v171, 0
  %v213 = vsel %vm184, %v172, 0
  %v216 = vsel %vm184, %v173, 0
  %v219 = vsel %vm184, %v174, 0
  %v222 = vsel %vm184, %v175, 0
  %v225 = vsel %vm184, %v176, 0
  %v228 = vsel %vm184, %v177, 0
  %v231 = vsel %vm184, %v178, 0
  %233 = vmatpush.msra.mxu0 0.0
  %234 = vmatpush.msra.mxu0 0.0
  %235 = vmatpush.msra.mxu0 0.0
  %236 = vmatpush.msra.mxu0 0.0
  %237 = vmatpush.msra.mxu0 0.0
  %238 = vmatpush.msra.mxu0 0.0
  %239 = vmatpush.msra.mxu0 0.0
  %240 = vmatpush.msra.mxu0 0.0
  %241 = vmatpush.msra.mxu0 0.0
  %242 = vmatpush.msra.mxu0 0.0
  %243 = vmatpush.msra.mxu0 0.0
  %244 = vmatpush.msra.mxu0 0.0
  %245 = vmatpush.msra.mxu0 %v182
  %246 = vmatpush.msra.mxu0 %v181
  %247 = vmatpush.msra.mxu0 %v180
  %248 = vmatpush.msra.mxu0 %v179
  %249 = vmatmul.f32.gmra.mxu0 %v186
  %v250 = vpop.f32.mrf.mxu0
  %v251 = vadd.f32 %v183, %v250
  %252 = vmatmul.f32.gmra.mxu0 %v189
  %v253 = vpop.f32.mrf.mxu0
  %v254 = vadd.f32 %v183, %v253
  %255 = vmatmul.f32.gmra.mxu0 %v192
  %v256 = vpop.f32.mrf.mxu0
  %v257 = vadd.f32 %v183, %v256
  %258 = vmatmul.f32.gmra.mxu0 %v195
  %v259 = vpop.f32.mrf.mxu0
  %v260 = vadd.f32 %v183, %v259
  %261 = vmatmul.f32.gmra.mxu0 %v198
  %v262 = vpop.f32.mrf.mxu0
  %v263 = vadd.f32 %v183, %v262
  %264 = vmatmul.f32.gmra.mxu0 %v201
  %v265 = vpop.f32.mrf.mxu0
  %v266 = vadd.f32 %v183, %v265
  %267 = vmatmul.f32.gmra.mxu0 %v204
  %v268 = vpop.f32.mrf.mxu0
  %v269 = vadd.f32 %v183, %v268
  %270 = vmatmul.f32.gmra.mxu0 %v207
  %v271 = vpop.f32.mrf.mxu0
  %v272 = vadd.f32 %v183, %v271
  %273 = vmatmul.f32.gmra.mxu0 %v210
  %v274 = vpop.f32.mrf.mxu0
  %v275 = vadd.f32 %v183, %v274
  %276 = vmatmul.f32.gmra.mxu0 %v213
  %v277 = vpop.f32.mrf.mxu0
  %v278 = vadd.f32 %v183, %v277
  %279 = vmatmul.f32.gmra.mxu0 %v216
  %v280 = vpop.f32.mrf.mxu0
  %v281 = vadd.f32 %v183, %v280
  %282 = vmatmul.f32.gmra.mxu0 %v219
  %v283 = vpop.f32.mrf.mxu0
  %v284 = vadd.f32 %v183, %v283
  %285 = vmatmul.f32.gmra.mxu0 %v222
  %v286 = vpop.f32.mrf.mxu0
  %v287 = vadd.f32 %v183, %v286
  %288 = vmatmul.f32.gmra.mxu0 %v225
  %v289 = vpop.f32.mrf.mxu0
  %v290 = vadd.f32 %v183, %v289
  %291 = vmatmul.f32.gmra.mxu0 %v228
  %v292 = vpop.f32.mrf.mxu0
  %v293 = vadd.f32 %v183, %v292
  %294 = vmatmul.f32.gmra.mxu0 %v231
  %v295 = vpop.f32.mrf.mxu0
  %v296 = vadd.f32 %v183, %v295
  %297 = vdwg.mxu0
  %vm298 = vcmask 523264
  %v299 = vsel %vm298, %v251, -inf
  %v300 = vsel %vm298, %v254, -inf
  %v301 = vsel %vm298, %v257, -inf
  %v302 = vmax.f32 %v299, %v301
  %v303 = vsel %vm298, %v260, -inf
  %v304 = vmax.f32 %v300, %v303
  %v305 = vsel %vm298, %v263, -inf
  %v306 = vmax.f32 %v302, %v305
  %v307 = vsel %vm298, %v266, -inf
  %v308 = vmax.f32 %v304, %v307
  %v309 = vsel %vm298, %v269, -inf
  %v310 = vmax.f32 %v306, %v309
  %v311 = vsel %vm298, %v272, -inf
  %v312 = vmax.f32 %v308, %v311
  %v313 = vmax.f32 %v310, %v312
  %v314 = vrot.slane %v313, 4
  %v315 = vmax.f32 %v313, %v314
  %v316 = vrot.slane %v315, 2
  %v317 = vmax.f32 %v315, %v316
  %v318 = vrot.slane %v317, 1
  %v319 = vmax.f32 %v317, %v318
  %v320 = vsel %vm298, %v275, -inf
  %v321 = vsel %vm298, %v278, -inf
  %v322 = vsel %vm298, %v281, -inf
  %v323 = vmax.f32 %v320, %v322
  %v324 = vsel %vm298, %v284, -inf
  %v325 = vmax.f32 %v321, %v324
  %v326 = vsel %vm298, %v287, -inf
  %v327 = vmax.f32 %v323, %v326
  %v328 = vsel %vm298, %v290, -inf
  %v329 = vmax.f32 %v325, %v328
  %v330 = vsel %vm298, %v293, -inf
  %v331 = vmax.f32 %v327, %v330
  %v332 = vsel %vm298, %v296, -inf
  %v333 = vmax.f32 %v329, %v332
  %v334 = vmax.f32 %v331, %v333
  %v335 = vrot.slane %v334, 4
  %v336 = vmax.f32 %v334, %v335
  %v337 = vrot.slane %v336, 2
  %v338 = vmax.f32 %v336, %v337
  %v339 = vrot.slane %v338, 1
  %v340 = vmax.f32 %v338, %v339
  %343 = vrot.lane.b32.xlu0 %v319, 64
  %v344 = vpop.permute.xlu0 %343
  %345 = vrot.lane.b32.xlu0 %v340, 64
  %v346 = vpop.permute.xlu0 %345
  %v349 = vsel %vm298, %v251, %v344
  %v350 = vsel %vm298, %v254, %v344
  %v351 = vsel %vm298, %v257, %v344
  %v352 = vsel %vm298, %v260, %v344
  %v353 = vsel %vm298, %v263, %v344
  %v354 = vsel %vm298, %v266, %v344
  %v355 = vsel %vm298, %v269, %v344
  %v356 = vsel %vm298, %v272, %v344
  %v357 = vsel %vm298, %v275, %v346
  %v358 = vsel %vm298, %v278, %v346
  %v359 = vsel %vm298, %v281, %v346
  %v360 = vsel %vm298, %v284, %v346
  %v361 = vsel %vm298, %v287, %v346
  %v362 = vsel %vm298, %v290, %v346
  %v363 = vsel %vm298, %v293, %v346
  %v364 = vsel %vm298, %v296, %v346
  %v365 = vld [vmem:[%s3] sm:$0xff]
  %v366 = vld [vmem:[%s3 + $0x30] sm:$0xff]
  %v367 = vld [vmem:[%s3 + $0x60] sm:$0xff]
  %v368 = vld [vmem:[%s3 + $0x90] sm:$0xff]
  %v369 = vld [vmem:[%s3 + $0xc0] sm:$0xff]
  %v370 = vld [vmem:[%s3 + $0xf0] sm:$0xff]
  %v371 = vld [vmem:[%s3 + $0x120] sm:$0xff]
  %v372 = vld [vmem:[%s3 + $0x150] sm:$0xff]
  %v373 = vld [vmem:[%s3 + $0x180] sm:$0xff]
  %v374 = vld [vmem:[%s3 + $0x1b0] sm:$0xff]
  %v375 = vld [vmem:[%s3 + $0x1e0] sm:$0xff]
  %v376 = vld [vmem:[%s3 + $0x210] sm:$0xff]
  %v377 = vld [vmem:[%s3 + $0x240] sm:$0xff]
  %v378 = vld [vmem:[%s3 + $0x270] sm:$0xff]
  %v379 = vld [vmem:[%s3 + $0x2a0] sm:$0xff]
  %v380 = vld [vmem:[%s3 + $0x2d0] sm:$0xff]
  %v381 = vld [vmem:[%s3 + $0x8] sm:$0xff]
  %v382 = vld [vmem:[%s3 + $0x38] sm:$0xff]
  %v383 = vld [vmem:[%s3 + $0x68] sm:$0xff]
  %v384 = vld [vmem:[%s3 + $0x98] sm:$0xff]
  %v385 = vld [vmem:[%s3 + $0xc8] sm:$0xff]
  %v386 = vld [vmem:[%s3 + $0xf8] sm:$0xff]
  %v387 = vld [vmem:[%s3 + $0x128] sm:$0xff]
  %v388 = vld [vmem:[%s3 + $0x158] sm:$0xff]
  %v389 = vld [vmem:[%s3 + $0x188] sm:$0xff]
  %v390 = vld [vmem:[%s3 + $0x1b8] sm:$0xff]
  %v391 = vld [vmem:[%s3 + $0x1e8] sm:$0xff]
  %v392 = vld [vmem:[%s3 + $0x218] sm:$0xff]
  %v393 = vld [vmem:[%s3 + $0x248] sm:$0xff]
  %v394 = vld [vmem:[%s3 + $0x278] sm:$0xff]
  %v395 = vld [vmem:[%s3 + $0x2a8] sm:$0xff]
  %v396 = vld [vmem:[%s3 + $0x2d8] sm:$0xff]
  %v397 = vld [vmem:[%s3 + $0x10] sm:$0xff]
  %v398 = vld [vmem:[%s3 + $0x40] sm:$0xff]
  %v399 = vld [vmem:[%s3 + $0x70] sm:$0xff]
  %v400 = vld [vmem:[%s3 + $0xa0] sm:$0xff]
  %v401 = vld [vmem:[%s3 + $0xd0] sm:$0xff]
  %v402 = vld [vmem:[%s3 + $0x100] sm:$0xff]
  %v403 = vld [vmem:[%s3 + $0x130] sm:$0xff]
  %v404 = vld [vmem:[%s3 + $0x160] sm:$0xff]
  %v405 = vld [vmem:[%s3 + $0x190] sm:$0xff]
  %v406 = vld [vmem:[%s3 + $0x1c0] sm:$0xff]
  %v407 = vld [vmem:[%s3 + $0x1f0] sm:$0xff]
  %v408 = vld [vmem:[%s3 + $0x220] sm:$0xff]
  %v409 = vld [vmem:[%s3 + $0x250] sm:$0xff]
  %v410 = vld [vmem:[%s3 + $0x280] sm:$0xff]
  %v411 = vld [vmem:[%s3 + $0x2b0] sm:$0xff]
  %v412 = vld [vmem:[%s3 + $0x2e0] sm:$0xff]
  %v413 = vld [vmem:[%s5 + $0x2] ss:$0 sm:$0xff]
  %414 = vmatpush.msra.mxu0 %v380
  %415 = vmatpush.msra.mxu0 %v379
  %416 = vmatpush.msra.mxu0 %v378
  %417 = vmatpush.msra.mxu0 %v377
  %418 = vmatpush.msra.mxu0 %v376
  %419 = vmatpush.msra.mxu0 %v375
  %420 = vmatpush.msra.mxu0 %v374
  %421 = vmatpush.msra.mxu0 %v373
  %422 = vmatpush.msra.mxu0 %v372
  %423 = vmatpush.msra.mxu0 %v371
  %424 = vmatpush.msra.mxu0 %v370
  %425 = vmatpush.msra.mxu0 %v369
  %426 = vmatpush.msra.mxu0 %v368
  %427 = vmatpush.msra.mxu0 %v367
  %428 = vmatpush.msra.mxu0 %v366
  %429 = vmatpush.msra.mxu0 %v365
  %430 = vmatmul.f32.gmra.mxu0 %v349
  %v431 = vpop.f32.mrf.mxu0
  %v432 = vadd.f32 %v413, %v431
  %433 = vmatmul.f32.gmra.mxu0 %v350
  %v434 = vpop.f32.mrf.mxu0
  %v435 = vadd.f32 %v413, %v434
  %436 = vmatmul.f32.gmra.mxu0 %v351
  %v437 = vpop.f32.mrf.mxu0
  %v438 = vadd.f32 %v413, %v437
  %439 = vmatmul.f32.gmra.mxu0 %v352
  %v440 = vpop.f32.mrf.mxu0
  %v441 = vadd.f32 %v413, %v440
  %442 = vmatmul.f32.gmra.mxu0 %v353
  %v443 = vpop.f32.mrf.mxu0
  %v444 = vadd.f32 %v413, %v443
  %445 = vmatmul.f32.gmra.mxu0 %v354
  %v446 = vpop.f32.mrf.mxu0
  %v447 = vadd.f32 %v413, %v446
  %448 = vmatmul.f32.gmra.mxu0 %v355
  %v449 = vpop.f32.mrf.mxu0
  %v450 = vadd.f32 %v413, %v449
  %451 = vmatmul.f32.gmra.mxu0 %v356
  %v452 = vpop.f32.mrf.mxu0
  %v453 = vadd.f32 %v413, %v452
  %454 = vmatmul.f32.gmra.mxu0 %v357
  %v455 = vpop.f32.mrf.mxu0
  %v456 = vadd.f32 %v413, %v455
  %457 = vmatmul.f32.gmra.mxu0 %v358
  %v458 = vpop.f32.mrf.mxu0
  %v459 = vadd.f32 %v413, %v458
  %460 = vmatmul.f32.gmra.mxu0 %v359
  %v461 = vpop.f32.mrf.mxu0
  %v462 = vadd.f32 %v413, %v461
  %463 = vmatmul.f32.gmra.mxu0 %v360
  %v464 = vpop.f32.mrf.mxu0
  %v465 = vadd.f32 %v413, %v464
  %466 = vmatmul.f32.gmra.mxu0 %v361
  %v467 = vpop.f32.mrf.mxu0
  %v468 = vadd.f32 %v413, %v467
  %469 = vmatmul.f32.gmra.mxu0 %v362
  %v470 = vpop.f32.mrf.mxu0
  %v471 = vadd.f32 %v413, %v470
  %472 = vmatmul.f32.gmra.mxu0 %v363
  %v473 = vpop.f32.mrf.mxu0
  %v474 = vadd.f32 %v413, %v473
  %475 = vmatmul.f32.gmra.mxu0 %v364
  %v476 = vpop.f32.mrf.mxu0
  %v477 = vadd.f32 %v413, %v476
  %478 = vdwg.mxu0
  %v479 = vmax.f32 %v432, 0.0
  %v480 = vmax.f32 %v435, 0.0
  %v481 = vmax.f32 %v438, 0.0
  %v482 = vmax.f32 %v441, 0.0
  %v483 = vmax.f32 %v444, 0.0
  %v484 = vmax.f32 %v447, 0.0
  %v485 = vmax.f32 %v450, 0.0
  %v486 = vmax.f32 %v453, 0.0
  %v487 = vmax.f32 %v456, 0.0
  %v488 = vmax.f32 %v459, 0.0
  %v489 = vmax.f32 %v462, 0.0
  %v490 = vmax.f32 %v465, 0.0
  %v491 = vmax.f32 %v468, 0.0
  %v492 = vmax.f32 %v471, 0.0
  %v493 = vmax.f32 %v474, 0.0
  %v494 = vmax.f32 %v477, 0.0
  %v495 = vld [vmem:[%s5 + $0x3] ss:$0 sm:$0xff]
  %496 = vmatpush.msra.mxu0 %v396
  %497 = vmatpush.msra.mxu0 %v395
  %498 = vmatpush.msra.mxu0 %v394
  %499 = vmatpush.msra.mxu0 %v393
  %500 = vmatpush.msra.mxu0 %v392
  %501 = vmatpush.msra.mxu0 %v391
  %502 = vmatpush.msra.mxu0 %v390
  %503 = vmatpush.msra.mxu0 %v389
  %504 = vmatpush.msra.mxu0 %v388
  %505 = vmatpush.msra.mxu0 %v387
  %506 = vmatpush.msra.mxu0 %v386
  %507 = vmatpush.msra.mxu0 %v385
  %508 = vmatpush.msra.mxu0 %v384
  %509 = vmatpush.msra.mxu0 %v383
  %510 = vmatpush.msra.mxu0 %v382
  %511 = vmatpush.msra.mxu0 %v381
  %512 = vmatmul.f32.gmra.mxu0 %v349
  %v513 = vpop.f32.mrf.mxu0
  %v514 = vadd.f32 %v495, %v513
  %515 = vmatmul.f32.gmra.mxu0 %v350
  %v516 = vpop.f32.mrf.mxu0
  %v517 = vadd.f32 %v495, %v516
  %518 = vmatmul.f32.gmra.mxu0 %v351
  %v519 = vpop.f32.mrf.mxu0
  %v520 = vadd.f32 %v495, %v519
  %521 = vmatmul.f32.gmra.mxu0 %v352
  %v522 = vpop.f32.mrf.mxu0
  %v523 = vadd.f32 %v495, %v522
  %524 = vmatmul.f32.gmra.mxu0 %v353
  %v525 = vpop.f32.mrf.mxu0
  %v526 = vadd.f32 %v495, %v525
  %527 = vmatmul.f32.gmra.mxu0 %v354
  %v528 = vpop.f32.mrf.mxu0
  %v529 = vadd.f32 %v495, %v528
  %530 = vmatmul.f32.gmra.mxu0 %v355
  %v531 = vpop.f32.mrf.mxu0
  %v532 = vadd.f32 %v495, %v531
  %533 = vmatmul.f32.gmra.mxu0 %v356
  %v534 = vpop.f32.mrf.mxu0
  %v535 = vadd.f32 %v495, %v534
  %536 = vmatmul.f32.gmra.mxu0 %v357
  %v537 = vpop.f32.mrf.mxu0
  %v538 = vadd.f32 %v495, %v537
  %539 = vmatmul.f32.gmra.mxu0 %v358
  %v540 = vpop.f32.mrf.mxu0
  %v541 = vadd.f32 %v495, %v540
  %542 = vmatmul.f32.gmra.mxu0 %v359
  %v543 = vpop.f32.mrf.mxu0
  %v544 = vadd.f32 %v495, %v543
  %545 = vmatmul.f32.gmra.mxu0 %v360
  %v546 = vpop.f32.mrf.mxu0
  %v547 = vadd.f32 %v495, %v546
  %548 = vmatmul.f32.gmra.mxu0 %v361
  %v549 = vpop.f32.mrf.mxu0
  %v550 = vadd.f32 %v495, %v549
  %551 = vmatmul.f32.gmra.mxu0 %v362
  %v552 = vpop.f32.mrf.mxu0
  %v553 = vadd.f32 %v495, %v552
  %554 = vmatmul.f32.gmra.mxu0 %v363
  %v555 = vpop.f32.mrf.mxu0
  %v556 = vadd.f32 %v495, %v555
  %557 = vmatmul.f32.gmra.mxu0 %v364
  %v558 = vpop.f32.mrf.mxu0
  %v559 = vadd.f32 %v495, %v558
  %560 = vdwg.mxu0
  %v561 = vmax.f32 %v514, 0.0
  %v562 = vmax.f32 %v517, 0.0
  %v563 = vmax.f32 %v520, 0.0
  %v564 = vmax.f32 %v523, 0.0
  %v565 = vmax.f32 %v526, 0.0
  %v566 = vmax.f32 %v529, 0.0
  %v567 = vmax.f32 %v532, 0.0
  %v568 = vmax.f32 %v535, 0.0
  %v569 = vmax.f32 %v538, 0.0
  %v570 = vmax.f32 %v541, 0.0
  %v571 = vmax.f32 %v544, 0.0
  %v572 = vmax.f32 %v547, 0.0
  %v573 = vmax.f32 %v550, 0.0
  %v574 = vmax.f32 %v553, 0.0
  %v575 = vmax.f32 %v556, 0.0
  %v576 = vmax.f32 %v559, 0.0
  %v577 = vld [vmem:[%s5 + $0x4] ss:$0 sm:$0xff]
  %578 = vmatpush.msra.mxu0 %v412
  %579 = vmatpush.msra.mxu0 %v411
  %580 = vmatpush.msra.mxu0 %v410
  %581 = vmatpush.msra.mxu0 %v409
  %582 = vmatpush.msra.mxu0 %v408
  %583 = vmatpush.msra.mxu0 %v407
  %584 = vmatpush.msra.mxu0 %v406
  %585 = vmatpush.msra.mxu0 %v405
  %586 = vmatpush.msra.mxu0 %v404
  %587 = vmatpush.msra.mxu0 %v403
  %588 = vmatpush.msra.mxu0 %v402
  %589 = vmatpush.msra.mxu0 %v401
  %590 = vmatpush.msra.mxu0 %v400
  %591 = vmatpush.msra.mxu0 %v399
  %592 = vmatpush.msra.mxu0 %v398
  %593 = vmatpush.msra.mxu0 %v397
  %594 = vmatmul.f32.gmra.mxu0 %v349
  %v595 = vpop.f32.mrf.mxu0
  %v596 = vadd.f32 %v577, %v595
  %597 = vmatmul.f32.gmra.mxu0 %v350
  %v598 = vpop.f32.mrf.mxu0
  %v599 = vadd.f32 %v577, %v598
  %600 = vmatmul.f32.gmra.mxu0 %v351
  %v601 = vpop.f32.mrf.mxu0
  %v602 = vadd.f32 %v577, %v601
  %603 = vmatmul.f32.gmra.mxu0 %v352
  %v604 = vpop.f32.mrf.mxu0
  %v605 = vadd.f32 %v577, %v604
  %606 = vmatmul.f32.gmra.mxu0 %v353
  %v607 = vpop.f32.mrf.mxu0
  %v608 = vadd.f32 %v577, %v607
  %609 = vmatmul.f32.gmra.mxu0 %v354
  %v610 = vpop.f32.mrf.mxu0
  %v611 = vadd.f32 %v577, %v610
  %612 = vmatmul.f32.gmra.mxu0 %v355
  %v613 = vpop.f32.mrf.mxu0
  %v614 = vadd.f32 %v577, %v613
  %615 = vmatmul.f32.gmra.mxu0 %v356
  %v616 = vpop.f32.mrf.mxu0
  %v617 = vadd.f32 %v577, %v616
  %618 = vmatmul.f32.gmra.mxu0 %v357
  %v619 = vpop.f32.mrf.mxu0
  %v620 = vadd.f32 %v577, %v619
  %621 = vmatmul.f32.gmra.mxu0 %v358
  %v622 = vpop.f32.mrf.mxu0
  %v623 = vadd.f32 %v577, %v622
  %624 = vmatmul.f32.gmra.mxu0 %v359
  %v625 = vpop.f32.mrf.mxu0
  %v626 = vadd.f32 %v577, %v625
  %627 = vmatmul.f32.gmra.mxu0 %v360
  %v628 = vpop.f32.mrf.mxu0
  %v629 = vadd.f32 %v577, %v628
  %630 = vmatmul.f32.gmra.mxu0 %v361
  %v631 = vpop.f32.mrf.mxu0
  %v632 = vadd.f32 %v577, %v631
  %633 = vmatmul.f32.gmra.mxu0 %v362
  %v634 = vpop.f32.mrf.mxu0
  %v635 = vadd.f32 %v577, %v634
  %636 = vmatmul.f32.gmra.mxu0 %v363
  %v637 = vpop.f32.mrf.mxu0
  %v638 = vadd.f32 %v577, %v637
  %639 = vmatmul.f32.gmra.mxu0 %v364
  %v640 = vpop.f32.mrf.mxu0
  %v641 = vadd.f32 %v577, %v640
  %642 = vdwg.mxu0
  %v643 = vmax.f32 %v596, 0.0
  %v644 = vmax.f32 %v599, 0.0
  %v645 = vmax.f32 %v602, 0.0
  %v646 = vmax.f32 %v605, 0.0
  %v647 = vmax.f32 %v608, 0.0
  %v648 = vmax.f32 %v611, 0.0
  %v649 = vmax.f32 %v614, 0.0
  %v650 = vmax.f32 %v617, 0.0
  %v651 = vmax.f32 %v620, 0.0
  %v652 = vmax.f32 %v623, 0.0
  %v653 = vmax.f32 %v626, 0.0
  %v654 = vmax.f32 %v629, 0.0
  %v655 = vmax.f32 %v632, 0.0
  %v656 = vmax.f32 %v635, 0.0
  %v657 = vmax.f32 %v638, 0.0
  %v658 = vmax.f32 %v641, 0.0
  %v660 = vsel %vm184, %v561, 0
  %v663 = vsel %vm184, %v562, 0
  %v666 = vsel %vm184, %v563, 0
  %v669 = vsel %vm184, %v564, 0
  %v672 = vsel %vm184, %v565, 0
  %v675 = vsel %vm184, %v566, 0
  %v678 = vsel %vm184, %v567, 0
  %v681 = vsel %vm184, %v568, 0
  %v684 = vsel %vm184, %v479, 0
  %v687 = vsel %vm184, %v480, 0
  %v690 = vsel %vm184, %v481, 0
  %v693 = vsel %vm184, %v482, 0
  %v696 = vsel %vm184, %v483, 0
  %v699 = vsel %vm184, %v484, 0
  %v702 = vsel %vm184, %v485, 0
  %v705 = vsel %vm184, %v486, 0
  %707 = vmatpush.xpose.msra.mxu0 0.0
  %708 = vmatpush.xpose.msra.mxu0 0.0
  %709 = vmatpush.xpose.msra.mxu0 0.0
  %710 = vmatpush.xpose.msra.mxu0 0.0
  %711 = vmatpush.xpose.msra.mxu0 0.0
  %712 = vmatpush.xpose.msra.mxu0 0.0
  %713 = vmatpush.xpose.msra.mxu0 0.0
  %714 = vmatpush.xpose.msra.mxu0 0.0
  %715 = vmatpush.xpose.msra.mxu0 %v705
  %716 = vmatpush.xpose.msra.mxu0 %v702
  %717 = vmatpush.xpose.msra.mxu0 %v699
  %718 = vmatpush.xpose.msra.mxu0 %v696
  %719 = vmatpush.xpose.msra.mxu0 %v693
  %720 = vmatpush.xpose.msra.mxu0 %v690
  %721 = vmatpush.xpose.msra.mxu0 %v687
  %722 = vmatpush.xpose.msra.mxu0 %v684
  %723 = vmatmul.f32.gmra.mxu0 %v660
  %v724 = vpop.f32.mrf.mxu0
  %v725 = vadd.f32 0.0, %v724
  %726 = vmatmul.f32.gmra.mxu0 %v663
  %v727 = vpop.f32.mrf.mxu0
  %v728 = vadd.f32 0.0, %v727
  %729 = vmatmul.f32.gmra.mxu0 %v666
  %v730 = vpop.f32.mrf.mxu0
  %v731 = vadd.f32 0.0, %v730
  %732 = vmatmul.f32.gmra.mxu0 %v669
  %v733 = vpop.f32.mrf.mxu0
  %v734 = vadd.f32 0.0, %v733
  %735 = vmatmul.f32.gmra.mxu0 %v672
  %v736 = vpop.f32.mrf.mxu0
  %v737 = vadd.f32 0.0, %v736
  %738 = vmatmul.f32.gmra.mxu0 %v675
  %v739 = vpop.f32.mrf.mxu0
  %v740 = vadd.f32 0.0, %v739
  %741 = vmatmul.f32.gmra.mxu0 %v678
  %v742 = vpop.f32.mrf.mxu0
  %v743 = vadd.f32 0.0, %v742
  %744 = vmatmul.f32.gmra.mxu0 %v681
  %v745 = vpop.f32.mrf.mxu0
  %v746 = vadd.f32 0.0, %v745
  %747 = vdwg.mxu0
  %v749 = vsel %vm184, %v569, 0
  %v752 = vsel %vm184, %v570, 0
  %v755 = vsel %vm184, %v571, 0
  %v758 = vsel %vm184, %v572, 0
  %v761 = vsel %vm184, %v573, 0
  %v764 = vsel %vm184, %v574, 0
  %v767 = vsel %vm184, %v575, 0
  %v770 = vsel %vm184, %v576, 0
  %v773 = vsel %vm184, %v487, 0
  %v776 = vsel %vm184, %v488, 0
  %v779 = vsel %vm184, %v489, 0
  %v782 = vsel %vm184, %v490, 0
  %v785 = vsel %vm184, %v491, 0
  %v788 = vsel %vm184, %v492, 0
  %v791 = vsel %vm184, %v493, 0
  %v794 = vsel %vm184, %v494, 0
  %796 = vmatpush.xpose.msra.mxu0 0.0
  %797 = vmatpush.xpose.msra.mxu0 0.0
  %798 = vmatpush.xpose.msra.mxu0 0.0
  %799 = vmatpush.xpose.msra.mxu0 0.0
  %800 = vmatpush.xpose.msra.mxu0 0.0
  %801 = vmatpush.xpose.msra.mxu0 0.0
  %802 = vmatpush.xpose.msra.mxu0 0.0
  %803 = vmatpush.xpose.msra.mxu0 0.0
  %804 = vmatpush.xpose.msra.mxu0 %v794
  %805 = vmatpush.xpose.msra.mxu0 %v791
  %806 = vmatpush.xpose.msra.mxu0 %v788
  %807 = vmatpush.xpose.msra.mxu0 %v785
  %808 = vmatpush.xpose.msra.mxu0 %v782
  %809 = vmatpush.xpose.msra.mxu0 %v779
  %810 = vmatpush.xpose.msra.mxu0 %v776
  %811 = vmatpush.xpose.msra.mxu0 %v773
  %812 = vmatmul.f32.gmra.mxu0 %v749
  %v813 = vpop.f32.mrf.mxu0
  %v814 = vadd.f32 0.0, %v813
  %815 = vmatmul.f32.gmra.mxu0 %v752
  %v816 = vpop.f32.mrf.mxu0
  %v817 = vadd.f32 0.0, %v816
  %818 = vmatmul.f32.gmra.mxu0 %v755
  %v819 = vpop.f32.mrf.mxu0
  %v820 = vadd.f32 0.0, %v819
  %821 = vmatmul.f32.gmra.mxu0 %v758
  %v822 = vpop.f32.mrf.mxu0
  %v823 = vadd.f32 0.0, %v822
  %824 = vmatmul.f32.gmra.mxu0 %v761
  %v825 = vpop.f32.mrf.mxu0
  %v826 = vadd.f32 0.0, %v825
  %827 = vmatmul.f32.gmra.mxu0 %v764
  %v828 = vpop.f32.mrf.mxu0
  %v829 = vadd.f32 0.0, %v828
  %830 = vmatmul.f32.gmra.mxu0 %v767
  %v831 = vpop.f32.mrf.mxu0
  %v832 = vadd.f32 0.0, %v831
  %833 = vmatmul.f32.gmra.mxu0 %v770
  %v834 = vpop.f32.mrf.mxu0
  %v835 = vadd.f32 0.0, %v834
  %836 = vdwg.mxu0
  %v837 = vsel %vm298, %v725, -inf
  %838 = vmax.xlane.f32.xlu0 %v837
  %v839 = vpop.xlane.xlu0 %838
  %v840 = vsel %vm298, %v728, -inf
  %841 = vmax.xlane.f32.xlu0 %v840
  %v842 = vpop.xlane.xlu0 %841
  %v843 = vsel %vm298, %v731, -inf
  %844 = vmax.xlane.f32.xlu0 %v843
  %v845 = vpop.xlane.xlu0 %844
  %v846 = vsel %vm298, %v734, -inf
  %847 = vmax.xlane.f32.xlu0 %v846
  %v848 = vpop.xlane.xlu0 %847
  %v849 = vsel %vm298, %v737, -inf
  %850 = vmax.xlane.f32.xlu0 %v849
  %v851 = vpop.xlane.xlu0 %850
  %v852 = vsel %vm298, %v740, -inf
  %853 = vmax.xlane.f32.xlu0 %v852
  %v854 = vpop.xlane.xlu0 %853
  %v855 = vsel %vm298, %v743, -inf
  %856 = vmax.xlane.f32.xlu0 %v855
  %v857 = vpop.xlane.xlu0 %856
  %v858 = vsel %vm298, %v746, -inf
  %859 = vmax.xlane.f32.xlu0 %v858
  %v860 = vpop.xlane.xlu0 %859
  %v861 = vsel %vm298, %v814, -inf
  %862 = vmax.xlane.f32.xlu0 %v861
  %v863 = vpop.xlane.xlu0 %862
  %v864 = vsel %vm298, %v817, -inf
  %865 = vmax.xlane.f32.xlu0 %v864
  %v866 = vpop.xlane.xlu0 %865
  %v867 = vsel %vm298, %v820, -inf
  %868 = vmax.xlane.f32.xlu0 %v867
  %v869 = vpop.xlane.xlu0 %868
  %v870 = vsel %vm298, %v823, -inf
  %871 = vmax.xlane.f32.xlu0 %v870
  %v872 = vpop.xlane.xlu0 %871
  %v873 = vsel %vm298, %v826, -inf
  %874 = vmax.xlane.f32.xlu0 %v873
  %v875 = vpop.xlane.xlu0 %874
  %v876 = vsel %vm298, %v829, -inf
  %877 = vmax.xlane.f32.xlu0 %v876
  %v878 = vpop.xlane.xlu0 %877
  %v879 = vsel %vm298, %v832, -inf
  %880 = vmax.xlane.f32.xlu0 %v879
  %v881 = vpop.xlane.xlu0 %880
  %v882 = vsel %vm298, %v835, -inf
  %883 = vmax.xlane.f32.xlu0 %v882
  %v884 = vpop.xlane.xlu0 %883
  %v885 = vsub.f32 %v725, %v839
  %v886 = vsub.f32 %v728, %v842
  %v887 = vsub.f32 %v731, %v845
  %v888 = vsub.f32 %v734, %v848
  %v889 = vsub.f32 %v737, %v851
  %v890 = vsub.f32 %v740, %v854
  %v891 = vsub.f32 %v743, %v857
  %v892 = vsub.f32 %v746, %v860
  %v893 = vsub.f32 %v814, %v863
  %v894 = vsub.f32 %v817, %v866
  %v895 = vsub.f32 %v820, %v869
  %v896 = vsub.f32 %v823, %v872
  %v897 = vsub.f32 %v826, %v875
  %v898 = vsub.f32 %v829, %v878
  %v899 = vsub.f32 %v832, %v881
  %v900 = vsub.f32 %v835, %v884
  %v901 = vmul.f32 %v885, 1.442695
  %v902 = vpow.pop %v901
  %v903 = vmul.f32 %v886, 1.442695
  %v904 = vpow.pop %v903
  %v905 = vmul.f32 %v887, 1.442695
  %v906 = vpow.pop %v905
  %v907 = vmul.f32 %v888, 1.442695
  %v908 = vpow.pop %v907
  %v909 = vmul.f32 %v889, 1.442695
  %v910 = vpow.pop %v909
  %v911 = vmul.f32 %v890, 1.442695
  %v912 = vpow.pop %v911
  %v913 = vmul.f32 %v891, 1.442695
  %v914 = vpow.pop %v913
  %v915 = vmul.f32 %v892, 1.442695
  %v916 = vpow.pop %v915
  %v917 = vmul.f32 %v893, 1.442695
  %v918 = vpow.pop %v917
  %v919 = vmul.f32 %v894, 1.442695
  %v920 = vpow.pop %v919
  %v921 = vmul.f32 %v895, 1.442695
  %v922 = vpow.pop %v921
  %v923 = vmul.f32 %v896, 1.442695
  %v924 = vpow.pop %v923
  %v925 = vmul.f32 %v897, 1.442695
  %v926 = vpow.pop %v925
  %v927 = vmul.f32 %v898, 1.442695
  %v928 = vpow.pop %v927
  %v929 = vmul.f32 %v899, 1.442695
  %v930 = vpow.pop %v929
  %v931 = vmul.f32 %v900, 1.442695
  %v932 = vpow.pop %v931
  %v933 = vsel %vm298, %v902, 0.0
  %934 = vadd.xlane.f32.xlu0 %v933
  %v935 = vpop.xlane.xlu0 %934
  %v936 = vsel %vm298, %v904, 0.0
  %937 = vadd.xlane.f32.xlu0 %v936
  %v938 = vpop.xlane.xlu0 %937
  %v939 = vsel %vm298, %v906, 0.0
  %940 = vadd.xlane.f32.xlu0 %v939
  %v941 = vpop.xlane.xlu0 %940
  %v942 = vsel %vm298, %v908, 0.0
  %943 = vadd.xlane.f32.xlu0 %v942
  %v944 = vpop.xlane.xlu0 %943
  %v945 = vsel %vm298, %v910, 0.0
  %946 = vadd.xlane.f32.xlu0 %v945
  %v947 = vpop.xlane.xlu0 %946
  %v948 = vsel %vm298, %v912, 0.0
  %949 = vadd.xlane.f32.xlu0 %v948
  %v950 = vpop.xlane.xlu0 %949
  %v951 = vsel %vm298, %v914, 0.0
  %952 = vadd.xlane.f32.xlu0 %v951
  %v953 = vpop.xlane.xlu0 %952
  %v954 = vsel %vm298, %v916, 0.0
  %955 = vadd.xlane.f32.xlu0 %v954
  %v956 = vpop.xlane.xlu0 %955
  %v957 = vsel %vm298, %v918, 0.0
  %958 = vadd.xlane.f32.xlu0 %v957
  %v959 = vpop.xlane.xlu0 %958
  %v960 = vsel %vm298, %v920, 0.0
  %961 = vadd.xlane.f32.xlu0 %v960
  %v962 = vpop.xlane.xlu0 %961
  %v963 = vsel %vm298, %v922, 0.0
  %964 = vadd.xlane.f32.xlu0 %v963
  %v965 = vpop.xlane.xlu0 %964
  %v966 = vsel %vm298, %v924, 0.0
  %967 = vadd.xlane.f32.xlu0 %v966
  %v968 = vpop.xlane.xlu0 %967
  %v969 = vsel %vm298, %v926, 0.0
  %970 = vadd.xlane.f32.xlu0 %v969
  %v971 = vpop.xlane.xlu0 %970
  %v972 = vsel %vm298, %v928, 0.0
  %973 = vadd.xlane.f32.xlu0 %v972
  %v974 = vpop.xlane.xlu0 %973
  %v975 = vsel %vm298, %v930, 0.0
  %976 = vadd.xlane.f32.xlu0 %v975
  %v977 = vpop.xlane.xlu0 %976
  %v978 = vsel %vm298, %v932, 0.0
  %979 = vadd.xlane.f32.xlu0 %v978
  %v980 = vpop.xlane.xlu0 %979
  %v981 = vrcp.pop %v935
  %v982 = vrcp.pop %v938
  %v983 = vrcp.pop %v941
  %v984 = vrcp.pop %v944
  %v985 = vrcp.pop %v947
  %v986 = vrcp.pop %v950
  %v987 = vrcp.pop %v953
  %v988 = vrcp.pop %v956
  %v989 = vrcp.pop %v959
  %v990 = vrcp.pop %v962
  %v991 = vrcp.pop %v965
  %v992 = vrcp.pop %v968
  %v993 = vrcp.pop %v971
  %v994 = vrcp.pop %v974
  %v995 = vrcp.pop %v977
  %v996 = vrcp.pop %v980
  %v997 = vmul.f32 %v902, %v981
  %v998 = vmul.f32 %v904, %v982
  %v999 = vmul.f32 %v906, %v983
  %v1000 = vmul.f32 %v908, %v984
  %v1001 = vmul.f32 %v910, %v985
  %v1002 = vmul.f32 %v912, %v986
  %v1003 = vmul.f32 %v914, %v987
  %v1004 = vmul.f32 %v916, %v988
  %v1005 = vmul.f32 %v918, %v989
  %v1006 = vmul.f32 %v920, %v990
  %v1007 = vmul.f32 %v922, %v991
  %v1008 = vmul.f32 %v924, %v992
  %v1009 = vmul.f32 %v926, %v993
  %v1010 = vmul.f32 %v928, %v994
  %v1011 = vmul.f32 %v930, %v995
  %v1012 = vmul.f32 %v932, %v996
  %1013 = vxpose.xlu0.b32.start [1/16] %v997, 128
  %1014 = vxpose.xlu0.b32.cont [2/16] %v998, 128
  %1015 = vxpose.xlu0.b32.cont [3/16] %v999, 128
  %1016 = vxpose.xlu0.b32.cont [4/16] %v1000, 128
  %1017 = vxpose.xlu0.b32.cont [5/16] %v1001, 128
  %1018 = vxpose.xlu0.b32.cont [6/16] %v1002, 128
  %1019 = vxpose.xlu0.b32.cont [7/16] %v1003, 128
  %1020 = vxpose.xlu0.b32.cont [8/16] %v1004, 128
  %1021 = vxpose.xlu0.b32.cont [9/16] 0.0, 128
  %1022 = vxpose.xlu0.b32.cont [10/16] 0.0, 128
  %1023 = vxpose.xlu0.b32.cont [11/16] 0.0, 128
  %1024 = vxpose.xlu0.b32.cont [12/16] 0.0, 128
  %1025 = vxpose.xlu0.b32.cont [13/16] 0.0, 128
  %1026 = vxpose.xlu0.b32.cont [14/16] 0.0, 128
  %1027 = vxpose.xlu0.b32.cont [15/16] 0.0, 128
  %1028 = vxpose.xlu0.b32.end [16/16] 0.0, 128
  %v1029 = vpop.trf.xlu0
  %v1030 = vpop.trf.xlu0
  %v1031 = vpop.trf.xlu0
  %v1032 = vpop.trf.xlu0
  %v1033 = vpop.trf.xlu0
  %v1034 = vpop.trf.xlu0
  %v1035 = vpop.trf.xlu0
  %v1036 = vpop.trf.xlu0
  %v1037 = vpop.trf.xlu0
  %v1038 = vpop.trf.xlu0
  %v1039 = vpop.trf.xlu0
  %v1040 = vpop.trf.xlu0
  %v1041 = vpop.trf.xlu0
  %v1042 = vpop.trf.xlu0
  %v1043 = vpop.trf.xlu0
  %v1044 = vpop.trf.xlu0
  %v1046 = vsel %vm298, %v1029, 0
  %v1049 = vsel %vm298, %v1030, 0
  %v1052 = vsel %vm298, %v1031, 0
  %v1055 = vsel %vm298, %v1032, 0
  %v1058 = vsel %vm298, %v1033, 0
  %v1061 = vsel %vm298, %v1034, 0
  %v1064 = vsel %vm298, %v1035, 0
  %v1067 = vsel %vm298, %v1036, 0
  %1069 = vmatpush.msra.mxu0 0.0
  %1070 = vmatpush.msra.mxu0 0.0
  %1071 = vmatpush.msra.mxu0 0.0
  %1072 = vmatpush.msra.mxu0 0.0
  %1073 = vmatpush.msra.mxu0 0.0
  %1074 = vmatpush.msra.mxu0 0.0
  %1075 = vmatpush.msra.mxu0 0.0
  %1076 = vmatpush.msra.mxu0 0.0
  %1077 = vmatpush.msra.mxu0 %v650
  %1078 = vmatpush.msra.mxu0 %v649
  %1079 = vmatpush.msra.mxu0 %v648
  %1080 = vmatpush.msra.mxu0 %v647
  %1081 = vmatpush.msra.mxu0 %v646
  %1082 = vmatpush.msra.mxu0 %v645
  %1083 = vmatpush.msra.mxu0 %v644
  %1084 = vmatpush.msra.mxu0 %v643
  %1085 = vmatmul.f32.gmra.mxu0 %v1046
  %v1086 = vpop.f32.mrf.mxu0
  %v1087 = vadd.f32 0.0, %v1086
  %1088 = vmatmul.f32.gmra.mxu0 %v1049
  %v1089 = vpop.f32.mrf.mxu0
  %v1090 = vadd.f32 0.0, %v1089
  %1091 = vmatmul.f32.gmra.mxu0 %v1052
  %v1092 = vpop.f32.mrf.mxu0
  %v1093 = vadd.f32 0.0, %v1092
  %1094 = vmatmul.f32.gmra.mxu0 %v1055
  %v1095 = vpop.f32.mrf.mxu0
  %v1096 = vadd.f32 0.0, %v1095
  %1097 = vmatmul.f32.gmra.mxu0 %v1058
  %v1098 = vpop.f32.mrf.mxu0
  %v1099 = vadd.f32 0.0, %v1098
  %1100 = vmatmul.f32.gmra.mxu0 %v1061
  %v1101 = vpop.f32.mrf.mxu0
  %v1102 = vadd.f32 0.0, %v1101
  %1103 = vmatmul.f32.gmra.mxu0 %v1064
  %v1104 = vpop.f32.mrf.mxu0
  %v1105 = vadd.f32 0.0, %v1104
  %1106 = vmatmul.f32.gmra.mxu0 %v1067
  %v1107 = vpop.f32.mrf.mxu0
  %v1108 = vadd.f32 0.0, %v1107
  %1109 = vdwg.mxu0
  %1110 = vxpose.xlu0.b32.start [1/16] %v1005, 128
  %1111 = vxpose.xlu0.b32.cont [2/16] %v1006, 128
  %1112 = vxpose.xlu0.b32.cont [3/16] %v1007, 128
  %1113 = vxpose.xlu0.b32.cont [4/16] %v1008, 128
  %1114 = vxpose.xlu0.b32.cont [5/16] %v1009, 128
  %1115 = vxpose.xlu0.b32.cont [6/16] %v1010, 128
  %1116 = vxpose.xlu0.b32.cont [7/16] %v1011, 128
  %1117 = vxpose.xlu0.b32.cont [8/16] %v1012, 128
  %1118 = vxpose.xlu0.b32.cont [9/16] 0.0, 128
  %1119 = vxpose.xlu0.b32.cont [10/16] 0.0, 128
  %1120 = vxpose.xlu0.b32.cont [11/16] 0.0, 128
  %1121 = vxpose.xlu0.b32.cont [12/16] 0.0, 128
  %1122 = vxpose.xlu0.b32.cont [13/16] 0.0, 128
  %1123 = vxpose.xlu0.b32.cont [14/16] 0.0, 128
  %1124 = vxpose.xlu0.b32.cont [15/16] 0.0, 128
  %1125 = vxpose.xlu0.b32.end [16/16] 0.0, 128
  %v1126 = vpop.trf.xlu0
  %v1127 = vpop.trf.xlu0
  %v1128 = vpop.trf.xlu0
  %v1129 = vpop.trf.xlu0
  %v1130 = vpop.trf.xlu0
  %v1131 = vpop.trf.xlu0
  %v1132 = vpop.trf.xlu0
  %v1133 = vpop.trf.xlu0
  %v1134 = vpop.trf.xlu0
  %v1135 = vpop.trf.xlu0
  %v1136 = vpop.trf.xlu0
  %v1137 = vpop.trf.xlu0
  %v1138 = vpop.trf.xlu0
  %v1139 = vpop.trf.xlu0
  %v1140 = vpop.trf.xlu0
  %v1141 = vpop.trf.xlu0
  %v1143 = vsel %vm298, %v1126, 0
  %v1146 = vsel %vm298, %v1127, 0
  %v1149 = vsel %vm298, %v1128, 0
  %v1152 = vsel %vm298, %v1129, 0
  %v1155 = vsel %vm298, %v1130, 0
  %v1158 = vsel %vm298, %v1131, 0
  %v1161 = vsel %vm298, %v1132, 0
  %v1164 = vsel %vm298, %v1133, 0
  %1166 = vmatpush.msra.mxu0 0.0
  %1167 = vmatpush.msra.mxu0 0.0
  %1168 = vmatpush.msra.mxu0 0.0
  %1169 = vmatpush.msra.mxu0 0.0
  %1170 = vmatpush.msra.mxu0 0.0
  %1171 = vmatpush.msra.mxu0 0.0
  %1172 = vmatpush.msra.mxu0 0.0
  %1173 = vmatpush.msra.mxu0 0.0
  %1174 = vmatpush.msra.mxu0 %v658
  %1175 = vmatpush.msra.mxu0 %v657
  %1176 = vmatpush.msra.mxu0 %v656
  %1177 = vmatpush.msra.mxu0 %v655
  %1178 = vmatpush.msra.mxu0 %v654
  %1179 = vmatpush.msra.mxu0 %v653
  %1180 = vmatpush.msra.mxu0 %v652
  %1181 = vmatpush.msra.mxu0 %v651
  %1182 = vmatmul.f32.gmra.mxu0 %v1143
  %v1183 = vpop.f32.mrf.mxu0
  %v1184 = vadd.f32 0.0, %v1183
  %1185 = vmatmul.f32.gmra.mxu0 %v1146
  %v1186 = vpop.f32.mrf.mxu0
  %v1187 = vadd.f32 0.0, %v1186
  %1188 = vmatmul.f32.gmra.mxu0 %v1149
  %v1189 = vpop.f32.mrf.mxu0
  %v1190 = vadd.f32 0.0, %v1189
  %1191 = vmatmul.f32.gmra.mxu0 %v1152
  %v1192 = vpop.f32.mrf.mxu0
  %v1193 = vadd.f32 0.0, %v1192
  %1194 = vmatmul.f32.gmra.mxu0 %v1155
  %v1195 = vpop.f32.mrf.mxu0
  %v1196 = vadd.f32 0.0, %v1195
  %1197 = vmatmul.f32.gmra.mxu0 %v1158
  %v1198 = vpop.f32.mrf.mxu0
  %v1199 = vadd.f32 0.0, %v1198
  %1200 = vmatmul.f32.gmra.mxu0 %v1161
  %v1201 = vpop.f32.mrf.mxu0
  %v1202 = vadd.f32 0.0, %v1201
  %1203 = vmatmul.f32.gmra.mxu0 %v1164
  %v1204 = vpop.f32.mrf.mxu0
  %v1205 = vadd.f32 0.0, %v1204
  %1206 = vdwg.mxu0
  %s1207 = sld [smem:[#allocation2]]
  %v1208 = vstv %s1207
  %v1209 = vmul.f32 %v1208, %v1087
  %v1210 = vmul.f32 %v1208, %v1090
  %v1211 = vmul.f32 %v1208, %v1093
  %v1212 = vmul.f32 %v1208, %v1096
  %v1213 = vmul.f32 %v1208, %v1099
  %v1214 = vmul.f32 %v1208, %v1102
  %v1215 = vmul.f32 %v1208, %v1105
  %v1216 = vmul.f32 %v1208, %v1108
  %v1217 = vmul.f32 %v1208, %v1184
  %v1218 = vmul.f32 %v1208, %v1187
  %v1219 = vmul.f32 %v1208, %v1190
  %v1220 = vmul.f32 %v1208, %v1193
  %v1221 = vmul.f32 %v1208, %v1196
  %v1222 = vmul.f32 %v1208, %v1199
  %v1223 = vmul.f32 %v1208, %v1202
  %v1224 = vmul.f32 %v1208, %v1205
  %v1225 = vadd.f32 %v1209, %v349
  %v1226 = vadd.f32 %v1210, %v350
  %v1227 = vadd.f32 %v1211, %v351
  %v1228 = vadd.f32 %v1212, %v352
  %v1229 = vadd.f32 %v1213, %v353
  %v1230 = vadd.f32 %v1214, %v354
  %v1231 = vadd.f32 %v1215, %v355
  %v1232 = vadd.f32 %v1216, %v356
  %v1233 = vadd.f32 %v1217, %v357
  %v1234 = vadd.f32 %v1218, %v358
  %v1235 = vadd.f32 %v1219, %v359
  %v1236 = vadd.f32 %v1220, %v360
  %v1237 = vadd.f32 %v1221, %v361
  %v1238 = vadd.f32 %v1222, %v362
  %v1239 = vadd.f32 %v1223, %v363
  %v1240 = vadd.f32 %v1224, %v364
  %v1241 = vld [vmem:[%s3 + $0x18] sm:$0xff]
  %v1242 = vld [vmem:[%s3 + $0x48] sm:$0xff]
  %v1243 = vld [vmem:[%s3 + $0x78] sm:$0xff]
  %v1244 = vld [vmem:[%s3 + $0xa8] sm:$0xff]
  %v1245 = vld [vmem:[%s3 + $0xd8] sm:$0xff]
  %v1246 = vld [vmem:[%s3 + $0x108] sm:$0xff]
  %v1247 = vld [vmem:[%s3 + $0x138] sm:$0xff]
  %v1248 = vld [vmem:[%s3 + $0x168] sm:$0xff]
  %v1249 = vld [vmem:[%s3 + $0x198] sm:$0xff]
  %v1250 = vld [vmem:[%s3 + $0x1c8] sm:$0xff]
  %v1251 = vld [vmem:[%s3 + $0x1f8] sm:$0xff]
  %v1252 = vld [vmem:[%s3 + $0x228] sm:$0xff]
  %v1253 = vld [vmem:[%s3 + $0x258] sm:$0xff]
  %v1254 = vld [vmem:[%s3 + $0x288] sm:$0xff]
  %v1255 = vld [vmem:[%s3 + $0x2b8] sm:$0xff]
  %v1256 = vld [vmem:[%s3 + $0x2e8] sm:$0xff]
  %v1257 = vld [vmem:[%s3 + $0x20] sm:$0xff]
  %v1258 = vld [vmem:[%s3 + $0x28] sm:$0xff]
  %v1259 = vld [vmem:[%s3 + $0x50] sm:$0xff]
  %v1260 = vld [vmem:[%s3 + $0x58] sm:$0xff]
  %v1261 = vld [vmem:[%s3 + $0x80] sm:$0xff]
  %v1262 = vld [vmem:[%s3 + $0x88] sm:$0xff]
  %v1263 = vld [vmem:[%s3 + $0xb0] sm:$0xff]
  %v1264 = vld [vmem:[%s3 + $0xb8] sm:$0xff]
  %v1265 = vld [vmem:[%s3 + $0xe0] sm:$0xff]
  %v1266 = vld [vmem:[%s3 + $0xe8] sm:$0xff]
  %v1267 = vld [vmem:[%s3 + $0x110] sm:$0xff]
  %v1268 = vld [vmem:[%s3 + $0x118] sm:$0xff]
  %v1269 = vld [vmem:[%s3 + $0x140] sm:$0xff]
  %v1270 = vld [vmem:[%s3 + $0x148] sm:$0xff]
  %v1271 = vld [vmem:[%s3 + $0x170] sm:$0xff]
  %v1272 = vld [vmem:[%s3 + $0x178] sm:$0xff]
  %v1273 = vld [vmem:[%s3 + $0x1a0] sm:$0xff]
  %v1274 = vld [vmem:[%s3 + $0x1a8] sm:$0xff]
  %v1275 = vld [vmem:[%s3 + $0x1d0] sm:$0xff]
  %v1276 = vld [vmem:[%s3 + $0x1d8] sm:$0xff]
  %v1277 = vld [vmem:[%s3 + $0x200] sm:$0xff]
  %v1278 = vld [vmem:[%s3 + $0x208] sm:$0xff]
  %v1279 = vld [vmem:[%s3 + $0x230] sm:$0xff]
  %v1280 = vld [vmem:[%s3 + $0x238] sm:$0xff]
  %v1281 = vld [vmem:[%s3 + $0x260] sm:$0xff]
  %v1282 = vld [vmem:[%s3 + $0x268] sm:$0xff]
  %v1283 = vld [vmem:[%s3 + $0x290] sm:$0xff]
  %v1284 = vld [vmem:[%s3 + $0x298] sm:$0xff]
  %v1285 = vld [vmem:[%s3 + $0x2c0] sm:$0xff]
  %v1286 = vld [vmem:[%s3 + $0x2c8] sm:$0xff]
  %v1287 = vld [vmem:[%s3 + $0x2f0] sm:$0xff]
  %v1288 = vld [vmem:[%s3 + $0x2f8] sm:$0xff]
  %v1289 = vld [vmem:[%s5 + $0x5] ss:$0 sm:$0xff]
  %1290 = vmatpush.msra.mxu0 %v1256
  %1291 = vmatpush.msra.mxu0 %v1255
  %1292 = vmatpush.msra.mxu0 %v1254
  %1293 = vmatpush.msra.mxu0 %v1253
  %1294 = vmatpush.msra.mxu0 %v1252
  %1295 = vmatpush.msra.mxu0 %v1251
  %1296 = vmatpush.msra.mxu0 %v1250
  %1297 = vmatpush.msra.mxu0 %v1249
  %1298 = vmatpush.msra.mxu0 %v1248
  %1299 = vmatpush.msra.mxu0 %v1247
  %1300 = vmatpush.msra.mxu0 %v1246
  %1301 = vmatpush.msra.mxu0 %v1245
  %1302 = vmatpush.msra.mxu0 %v1244
  %1303 = vmatpush.msra.mxu0 %v1243
  %1304 = vmatpush.msra.mxu0 %v1242
  %1305 = vmatpush.msra.mxu0 %v1241
  %1306 = vmatmul.f32.gmra.mxu0 %v1225
  %v1307 = vpop.f32.mrf.mxu0
  %v1308 = vadd.f32 %v1289, %v1307
  %1309 = vmatmul.f32.gmra.mxu0 %v1226
  %v1310 = vpop.f32.mrf.mxu0
  %v1311 = vadd.f32 %v1289, %v1310
  %1312 = vmatmul.f32.gmra.mxu0 %v1227
  %v1313 = vpop.f32.mrf.mxu0
  %v1314 = vadd.f32 %v1289, %v1313
  %1315 = vmatmul.f32.gmra.mxu0 %v1228
  %v1316 = vpop.f32.mrf.mxu0
  %v1317 = vadd.f32 %v1289, %v1316
  %1318 = vmatmul.f32.gmra.mxu0 %v1229
  %v1319 = vpop.f32.mrf.mxu0
  %v1320 = vadd.f32 %v1289, %v1319
  %1321 = vmatmul.f32.gmra.mxu0 %v1230
  %v1322 = vpop.f32.mrf.mxu0
  %v1323 = vadd.f32 %v1289, %v1322
  %1324 = vmatmul.f32.gmra.mxu0 %v1231
  %v1325 = vpop.f32.mrf.mxu0
  %v1326 = vadd.f32 %v1289, %v1325
  %1327 = vmatmul.f32.gmra.mxu0 %v1232
  %v1328 = vpop.f32.mrf.mxu0
  %v1329 = vadd.f32 %v1289, %v1328
  %1330 = vmatmul.f32.gmra.mxu0 %v1233
  %v1331 = vpop.f32.mrf.mxu0
  %v1332 = vadd.f32 %v1289, %v1331
  %1333 = vmatmul.f32.gmra.mxu0 %v1234
  %v1334 = vpop.f32.mrf.mxu0
  %v1335 = vadd.f32 %v1289, %v1334
  %1336 = vmatmul.f32.gmra.mxu0 %v1235
  %v1337 = vpop.f32.mrf.mxu0
  %v1338 = vadd.f32 %v1289, %v1337
  %1339 = vmatmul.f32.gmra.mxu0 %v1236
  %v1340 = vpop.f32.mrf.mxu0
  %v1341 = vadd.f32 %v1289, %v1340
  %1342 = vmatmul.f32.gmra.mxu0 %v1237
  %v1343 = vpop.f32.mrf.mxu0
  %v1344 = vadd.f32 %v1289, %v1343
  %1345 = vmatmul.f32.gmra.mxu0 %v1238
  %v1346 = vpop.f32.mrf.mxu0
  %v1347 = vadd.f32 %v1289, %v1346
  %1348 = vmatmul.f32.gmra.mxu0 %v1239
  %v1349 = vpop.f32.mrf.mxu0
  %v1350 = vadd.f32 %v1289, %v1349
  %1351 = vmatmul.f32.gmra.mxu0 %v1240
  %v1352 = vpop.f32.mrf.mxu0
  %v1353 = vadd.f32 %v1289, %v1352
  %1354 = vdwg.mxu0
  %v1355 = vmax.f32 %v1308, 0.0
  %v1356 = vmax.f32 %v1311, 0.0
  %v1357 = vmax.f32 %v1314, 0.0
  %v1358 = vmax.f32 %v1317, 0.0
  %v1359 = vmax.f32 %v1320, 0.0
  %v1360 = vmax.f32 %v1323, 0.0
  %v1361 = vmax.f32 %v1326, 0.0
  %v1362 = vmax.f32 %v1329, 0.0
  %v1363 = vmax.f32 %v1332, 0.0
  %v1364 = vmax.f32 %v1335, 0.0
  %v1365 = vmax.f32 %v1338, 0.0
  %v1366 = vmax.f32 %v1341, 0.0
  %v1367 = vmax.f32 %v1344, 0.0
  %v1368 = vmax.f32 %v1347, 0.0
  %v1369 = vmax.f32 %v1350, 0.0
  %v1370 = vmax.f32 %v1353, 0.0
  %s1371 = scalar_lea.vmem %s5, 6
  %v1372 = vld [vmem:[%s1371] ss:$8 sm:$0x3]
  %v1374 = vperm.slane %v1372, 0
  %v1375 = vperm.slane %v1372, 1
  %1378 = vmatpush.msra.mxu0 %v1287
  %1379 = vmatpush.msra.mxu0 %v1285
  %1380 = vmatpush.msra.mxu0 %v1283
  %1381 = vmatpush.msra.mxu0 %v1281
  %1382 = vmatpush.msra.mxu0 %v1279
  %1383 = vmatpush.msra.mxu0 %v1277
  %1384 = vmatpush.msra.mxu0 %v1275
  %1385 = vmatpush.msra.mxu0 %v1273
  %1386 = vmatpush.msra.mxu0 %v1271
  %1387 = vmatpush.msra.mxu0 %v1269
  %1388 = vmatpush.msra.mxu0 %v1267
  %1389 = vmatpush.msra.mxu0 %v1265
  %1390 = vmatpush.msra.mxu0 %v1263
  %1391 = vmatpush.msra.mxu0 %v1261
  %1392 = vmatpush.msra.mxu0 %v1259
  %1393 = vmatpush.msra.mxu0 %v1257
  %1394 = vmatmul.f32.gmra.mxu0 %v1355
  %v1395 = vpop.f32.mrf.mxu0
  %v1396 = vadd.f32 %v1374, %v1395
  %1397 = vmatmul.f32.gmra.mxu0 %v1356
  %v1398 = vpop.f32.mrf.mxu0
  %v1399 = vadd.f32 %v1374, %v1398
  %1400 = vmatmul.f32.gmra.mxu0 %v1357
  %v1401 = vpop.f32.mrf.mxu0
  %v1402 = vadd.f32 %v1374, %v1401
  %1403 = vmatmul.f32.gmra.mxu0 %v1358
  %v1404 = vpop.f32.mrf.mxu0
  %v1405 = vadd.f32 %v1374, %v1404
  %1406 = vmatmul.f32.gmra.mxu0 %v1359
  %v1407 = vpop.f32.mrf.mxu0
  %v1408 = vadd.f32 %v1374, %v1407
  %1409 = vmatmul.f32.gmra.mxu0 %v1360
  %v1410 = vpop.f32.mrf.mxu0
  %v1411 = vadd.f32 %v1374, %v1410
  %1412 = vmatmul.f32.gmra.mxu0 %v1361
  %v1413 = vpop.f32.mrf.mxu0
  %v1414 = vadd.f32 %v1374, %v1413
  %1415 = vmatmul.f32.gmra.mxu0 %v1362
  %v1416 = vpop.f32.mrf.mxu0
  %v1417 = vadd.f32 %v1374, %v1416
  %1418 = vmatmul.f32.gmra.mxu0 %v1363
  %v1419 = vpop.f32.mrf.mxu0
  %v1420 = vadd.f32 %v1374, %v1419
  %1421 = vmatmul.f32.gmra.mxu0 %v1364
  %v1422 = vpop.f32.mrf.mxu0
  %v1423 = vadd.f32 %v1374, %v1422
  %1424 = vmatmul.f32.gmra.mxu0 %v1365
  %v1425 = vpop.f32.mrf.mxu0
  %v1426 = vadd.f32 %v1374, %v1425
  %1427 = vmatmul.f32.gmra.mxu0 %v1366
  %v1428 = vpop.f32.mrf.mxu0
  %v1429 = vadd.f32 %v1374, %v1428
  %1430 = vmatmul.f32.gmra.mxu0 %v1367
  %v1431 = vpop.f32.mrf.mxu0
  %v1432 = vadd.f32 %v1374, %v1431
  %1433 = vmatmul.f32.gmra.mxu0 %v1368
  %v1434 = vpop.f32.mrf.mxu0
  %v1435 = vadd.f32 %v1374, %v1434
  %1436 = vmatmul.f32.gmra.mxu0 %v1369
  %v1437 = vpop.f32.mrf.mxu0
  %v1438 = vadd.f32 %v1374, %v1437
  %1439 = vmatmul.f32.gmra.mxu0 %v1370
  %v1440 = vpop.f32.mrf.mxu0
  %v1441 = vadd.f32 %v1374, %v1440
  %1442 = vdwg.mxu0
  %1443 = vmatpush.msra.mxu0 %v1288
  %1444 = vmatpush.msra.mxu0 %v1286
  %1445 = vmatpush.msra.mxu0 %v1284
  %1446 = vmatpush.msra.mxu0 %v1282
  %1447 = vmatpush.msra.mxu0 %v1280
  %1448 = vmatpush.msra.mxu0 %v1278
  %1449 = vmatpush.msra.mxu0 %v1276
  %1450 = vmatpush.msra.mxu0 %v1274
  %1451 = vmatpush.msra.mxu0 %v1272
  %1452 = vmatpush.msra.mxu0 %v1270
  %1453 = vmatpush.msra.mxu0 %v1268
  %1454 = vmatpush.msra.mxu0 %v1266
  %1455 = vmatpush.msra.mxu0 %v1264
  %1456 = vmatpush.msra.mxu0 %v1262
  %1457 = vmatpush.msra.mxu0 %v1260
  %1458 = vmatpush.msra.mxu0 %v1258
  %1459 = vmatmul.f32.gmra.mxu0 %v1355
  %v1460 = vpop.f32.mrf.mxu0
  %v1461 = vadd.f32 %v1375, %v1460
  %1462 = vmatmul.f32.gmra.mxu0 %v1356
  %v1463 = vpop.f32.mrf.mxu0
  %v1464 = vadd.f32 %v1375, %v1463
  %1465 = vmatmul.f32.gmra.mxu0 %v1357
  %v1466 = vpop.f32.mrf.mxu0
  %v1467 = vadd.f32 %v1375, %v1466
  %1468 = vmatmul.f32.gmra.mxu0 %v1358
  %v1469 = vpop.f32.mrf.mxu0
  %v1470 = vadd.f32 %v1375, %v1469
  %1471 = vmatmul.f32.gmra.mxu0 %v1359
  %v1472 = vpop.f32.mrf.mxu0
  %v1473 = vadd.f32 %v1375, %v1472
  %1474 = vmatmul.f32.gmra.mxu0 %v1360
  %v1475 = vpop.f32.mrf.mxu0
  %v1476 = vadd.f32 %v1375, %v1475
  %1477 = vmatmul.f32.gmra.mxu0 %v1361
  %v1478 = vpop.f32.mrf.mxu0
  %v1479 = vadd.f32 %v1375, %v1478
  %1480 = vmatmul.f32.gmra.mxu0 %v1362
  %v1481 = vpop.f32.mrf.mxu0
  %v1482 = vadd.f32 %v1375, %v1481
  %1483 = vmatmul.f32.gmra.mxu0 %v1363
  %v1484 = vpop.f32.mrf.mxu0
  %v1485 = vadd.f32 %v1375, %v1484
  %1486 = vmatmul.f32.gmra.mxu0 %v1364
  %v1487 = vpop.f32.mrf.mxu0
  %v1488 = vadd.f32 %v1375, %v1487
  %1489 = vmatmul.f32.gmra.mxu0 %v1365
  %v1490 = vpop.f32.mrf.mxu0
  %v1491 = vadd.f32 %v1375, %v1490
  %1492 = vmatmul.f32.gmra.mxu0 %v1366
  %v1493 = vpop.f32.mrf.mxu0
  %v1494 = vadd.f32 %v1375, %v1493
  %1495 = vmatmul.f32.gmra.mxu0 %v1367
  %v1496 = vpop.f32.mrf.mxu0
  %v1497 = vadd.f32 %v1375, %v1496
  %1498 = vmatmul.f32.gmra.mxu0 %v1368
  %v1499 = vpop.f32.mrf.mxu0
  %v1500 = vadd.f32 %v1375, %v1499
  %1501 = vmatmul.f32.gmra.mxu0 %v1369
  %v1502 = vpop.f32.mrf.mxu0
  %v1503 = vadd.f32 %v1375, %v1502
  %1504 = vmatmul.f32.gmra.mxu0 %v1370
  %v1505 = vpop.f32.mrf.mxu0
  %v1506 = vadd.f32 %v1375, %v1505
  %1507 = vdwg.mxu0
  %v1508 = vmax.f32 %v1396, %v1399
  %v1509 = vmax.f32 %v1508, %v1402
  %v1510 = vmax.f32 %v1509, %v1405
  %v1511 = vmax.f32 %v1510, %v1408
  %v1512 = vmax.f32 %v1511, %v1411
  %v1513 = vmax.f32 %v1512, %v1414
  %v1514 = vmax.f32 %v1513, %v1417
  %v1515 = vrot.slane %v1514, 4
  %v1516 = vmax.f32 %v1514, %v1515
  %v1517 = vrot.slane %v1516, 2
  %v1518 = vmax.f32 %v1516, %v1517
  %v1519 = vrot.slane %v1518, 1
  %v1520 = vmax.f32 %v1518, %v1519
  %v1521 = vmax.f32 %v1461, %v1464
  %v1522 = vmax.f32 %v1521, %v1467
  %v1523 = vmax.f32 %v1522, %v1470
  %v1524 = vmax.f32 %v1523, %v1473
  %v1525 = vmax.f32 %v1524, %v1476
  %v1526 = vmax.f32 %v1525, %v1479
  %v1527 = vmax.f32 %v1526, %v1482
  %v1528 = vrot.slane %v1527, 4
  %v1529 = vmax.f32 %v1527, %v1528
  %v1530 = vrot.slane %v1529, 2
  %v1531 = vmax.f32 %v1529, %v1530
  %v1532 = vrot.slane %v1531, 1
  %v1533 = vmax.f32 %v1531, %v1532
  %v1534 = vmax.f32 %v1420, %v1423
  %v1535 = vmax.f32 %v1534, %v1426
  %v1536 = vmax.f32 %v1535, %v1429
  %v1537 = vmax.f32 %v1536, %v1432
  %v1538 = vmax.f32 %v1537, %v1435
  %v1539 = vmax.f32 %v1538, %v1438
  %v1540 = vmax.f32 %v1539, %v1441
  %v1541 = vrot.slane %v1540, 4
  %v1542 = vmax.f32 %v1540, %v1541
  %v1543 = vrot.slane %v1542, 2
  %v1544 = vmax.f32 %v1542, %v1543
  %v1545 = vrot.slane %v1544, 1
  %v1546 = vmax.f32 %v1544, %v1545
  %v1547 = vmax.f32 %v1485, %v1488
  %v1548 = vmax.f32 %v1547, %v1491
  %v1549 = vmax.f32 %v1548, %v1494
  %v1550 = vmax.f32 %v1549, %v1497
  %v1551 = vmax.f32 %v1550, %v1500
  %v1552 = vmax.f32 %v1551, %v1503
  %v1553 = vmax.f32 %v1552, %v1506
  %v1554 = vrot.slane %v1553, 4
  %v1555 = vmax.f32 %v1553, %v1554
  %v1556 = vrot.slane %v1555, 2
  %v1557 = vmax.f32 %v1555, %v1556
  %v1558 = vrot.slane %v1557, 1
  %v1559 = vmax.f32 %v1557, %v1558
  %v1560 = vld [vmem:[%s4] sm:$0xff]
  %v1561 = vld [vmem:[%s4 + $0x8] sm:$0xff]
  %v1562 = vld [vmem:[%s4 + $0x18] sm:$0xff]
  %v1563 = vld [vmem:[%s4 + $0x20] sm:$0xff]
  %v1564 = vld [vmem:[%s4 + $0x30] sm:$0xff]
  %v1565 = vld [vmem:[%s4 + $0x38] sm:$0xff]
  %v1566 = vld [vmem:[%s4 + $0x48] sm:$0xff]
  %v1567 = vld [vmem:[%s4 + $0x50] sm:$0xff]
  %v1568 = vld [vmem:[%s4 + $0x60] sm:$0xff]
  %v1569 = vld [vmem:[%s4 + $0x68] sm:$0xff]
  %v1570 = vld [vmem:[%s4 + $0x78] sm:$0xff]
  %v1571 = vld [vmem:[%s4 + $0x80] sm:$0xff]
  %v1572 = vld [vmem:[%s4 + $0x90] sm:$0xff]
  %v1573 = vld [vmem:[%s4 + $0x98] sm:$0xff]
  %v1574 = vld [vmem:[%s4 + $0xa8] sm:$0xff]
  %v1575 = vld [vmem:[%s4 + $0xb0] sm:$0xff]
  %v1576 = vld [vmem:[%s4 + $0xc0] sm:$0xff]
  %v1577 = vld [vmem:[%s4 + $0xc8] sm:$0xff]
  %v1578 = vld [vmem:[%s4 + $0xd8] sm:$0xff]
  %v1579 = vld [vmem:[%s4 + $0xe0] sm:$0xff]
  %v1580 = vld [vmem:[%s4 + $0xf0] sm:$0xff]
  %v1581 = vld [vmem:[%s4 + $0xf8] sm:$0xff]
  %v1582 = vld [vmem:[%s4 + $0x108] sm:$0xff]
  %v1583 = vld [vmem:[%s4 + $0x110] sm:$0xff]
  %v1584 = vld [vmem:[%s4 + $0x120] sm:$0xff]
  %v1585 = vld [vmem:[%s4 + $0x128] sm:$0xff]
  %v1586 = vld [vmem:[%s4 + $0x138] sm:$0xff]
  %v1587 = vld [vmem:[%s4 + $0x140] sm:$0xff]
  %v1588 = vld [vmem:[%s4 + $0x150] sm:$0xff]
  %v1589 = vld [vmem:[%s4 + $0x158] sm:$0xff]
  %v1590 = vld [vmem:[%s4 + $0x168] sm:$0xff]
  %v1591 = vld [vmem:[%s4 + $0x170] sm:$0xff]
  %v1592 = vld [vmem:[%s4 + $0x180] sm:$0xff]
  %v1593 = vld [vmem:[%s4 + $0x188] sm:$0xff]
  %v1594 = vld [vmem:[%s4 + $0x198] sm:$0xff]
  %v1595 = vld [vmem:[%s4 + $0x1a0] sm:$0xff]
  %v1596 = vld [vmem:[%s4 + $0x1b0] sm:$0xff]
  %v1597 = vld [vmem:[%s4 + $0x1b8] sm:$0xff]
  %v1598 = vld [vmem:[%s4 + $0x1c8] sm:$0xff]
  %v1599 = vld [vmem:[%s4 + $0x1d0] sm:$0xff]
  %v1600 = vld [vmem:[%s4 + $0x1e0] sm:$0xff]
  %v1601 = vld [vmem:[%s4 + $0x1e8] sm:$0xff]
  %v1602 = vld [vmem:[%s4 + $0x1f8] sm:$0xff]
  %v1603 = vld [vmem:[%s4 + $0x200] sm:$0xff]
  %v1604 = vld [vmem:[%s4 + $0x210] sm:$0xff]
  %v1605 = vld [vmem:[%s4 + $0x218] sm:$0xff]
  %v1606 = vld [vmem:[%s4 + $0x228] sm:$0xff]
  %v1607 = vld [vmem:[%s4 + $0x230] sm:$0xff]
  %v1608 = vld [vmem:[%s4 + $0x240] sm:$0xff]
  %v1609 = vld [vmem:[%s4 + $0x248] sm:$0xff]
  %v1610 = vld [vmem:[%s4 + $0x258] sm:$0xff]
  %v1611 = vld [vmem:[%s4 + $0x260] sm:$0xff]
  %v1612 = vld [vmem:[%s4 + $0x270] sm:$0xff]
  %v1613 = vld [vmem:[%s4 + $0x278] sm:$0xff]
  %v1614 = vld [vmem:[%s4 + $0x288] sm:$0xff]
  %v1615 = vld [vmem:[%s4 + $0x290] sm:$0xff]
  %v1616 = vld [vmem:[%s4 + $0x2a0] sm:$0xff]
  %v1617 = vld [vmem:[%s4 + $0x2a8] sm:$0xff]
  %v1618 = vld [vmem:[%s4 + $0x2b8] sm:$0xff]
  %v1619 = vld [vmem:[%s4 + $0x2c0] sm:$0xff]
  %v1620 = vld [vmem:[%s4 + $0x2d0] sm:$0xff]
  %v1621 = vld [vmem:[%s4 + $0x2d8] sm:$0xff]
  %v1622 = vld [vmem:[%s4 + $0x2e8] sm:$0xff]
  %v1623 = vld [vmem:[%s4 + $0x2f0] sm:$0xff]
  %v1624 = vld [vmem:[%s4 + $0x10] sm:$0xff]
  %v1625 = vld [vmem:[%s4 + $0x28] sm:$0xff]
  %v1626 = vld [vmem:[%s4 + $0x40] sm:$0xff]
  %v1627 = vld [vmem:[%s4 + $0x58] sm:$0xff]
  %v1628 = vld [vmem:[%s4 + $0x70] sm:$0xff]
  %v1629 = vld [vmem:[%s4 + $0x88] sm:$0xff]
  %v1630 = vld [vmem:[%s4 + $0xa0] sm:$0xff]
  %v1631 = vld [vmem:[%s4 + $0xb8] sm:$0xff]
  %v1632 = vld [vmem:[%s4 + $0xd0] sm:$0xff]
  %v1633 = vld [vmem:[%s4 + $0xe8] sm:$0xff]
  %v1634 = vld [vmem:[%s4 + $0x100] sm:$0xff]
  %v1635 = vld [vmem:[%s4 + $0x118] sm:$0xff]
  %v1636 = vld [vmem:[%s4 + $0x130] sm:$0xff]
  %v1637 = vld [vmem:[%s4 + $0x148] sm:$0xff]
  %v1638 = vld [vmem:[%s4 + $0x160] sm:$0xff]
  %v1639 = vld [vmem:[%s4 + $0x178] sm:$0xff]
  %v1640 = vld [vmem:[%s4 + $0x190] sm:$0xff]
  %v1641 = vld [vmem:[%s4 + $0x1a8] sm:$0xff]
  %v1642 = vld [vmem:[%s4 + $0x1c0] sm:$0xff]
  %v1643 = vld [vmem:[%s4 + $0x1d8] sm:$0xff]
  %v1644 = vld [vmem:[%s4 + $0x1f0] sm:$0xff]
  %v1645 = vld [vmem:[%s4 + $0x208] sm:$0xff]
  %v1646 = vld [vmem:[%s4 + $0x220] sm:$0xff]
  %v1647 = vld [vmem:[%s4 + $0x238] sm:$0xff]
  %v1648 = vld [vmem:[%s4 + $0x250] sm:$0xff]
  %v1649 = vld [vmem:[%s4 + $0x268] sm:$0xff]
  %v1650 = vld [vmem:[%s4 + $0x280] sm:$0xff]
  %v1651 = vld [vmem:[%s4 + $0x298] sm:$0xff]
  %v1652 = vld [vmem:[%s4 + $0x2b0] sm:$0xff]
  %v1653 = vld [vmem:[%s4 + $0x2c8] sm:$0xff]
  %v1654 = vld [vmem:[%s4 + $0x2e0] sm:$0xff]
  %v1655 = vld [vmem:[%s4 + $0x2f8] sm:$0xff]
  %s1656 = scalar_lea.vmem %s5, 7
  %v1657 = vld [vmem:[%s1656] ss:$8 sm:$0x3]
  %v1659 = vperm.slane %v1657, 0
  %v1660 = vperm.slane %v1657, 1
  %vm1667 = vcmask 1041409
  %v1668 = vsel %vm1667, %v1546, %v1520
  %v1669 = vsel %vm1667, %v1559, %v1533
  %1672 = vmatpush.msra.mxu0 %v1590
  %1673 = vmatpush.msra.mxu0 %v1588
  %1674 = vmatpush.msra.mxu0 %v1586
  %1675 = vmatpush.msra.mxu0 %v1584
  %1676 = vmatpush.msra.mxu0 %v1582
  %1677 = vmatpush.msra.mxu0 %v1580
  %1678 = vmatpush.msra.mxu0 %v1578
  %1679 = vmatpush.msra.mxu0 %v1576
  %1680 = vmatpush.msra.mxu0 %v1574
  %1681 = vmatpush.msra.mxu0 %v1572
  %1682 = vmatpush.msra.mxu0 %v1570
  %1683 = vmatpush.msra.mxu0 %v1568
  %1684 = vmatpush.msra.mxu0 %v1566
  %1685 = vmatpush.msra.mxu0 %v1564
  %1686 = vmatpush.msra.mxu0 %v1562
  %1687 = vmatpush.msra.mxu0 %v1560
  %1688 = vmatmul.f32.gmra.mxu0 %v1668
  %v1689 = vpop.f32.mrf.mxu0
  %v1690 = vadd.f32 %v1659, %v1689
  %1691 = vdwg.mxu0
  %1692 = vmatpush.msra.mxu0 %v1622
  %1693 = vmatpush.msra.mxu0 %v1620
  %1694 = vmatpush.msra.mxu0 %v1618
  %1695 = vmatpush.msra.mxu0 %v1616
  %1696 = vmatpush.msra.mxu0 %v1614
  %1697 = vmatpush.msra.mxu0 %v1612
  %1698 = vmatpush.msra.mxu0 %v1610
  %1699 = vmatpush.msra.mxu0 %v1608
  %1700 = vmatpush.msra.mxu0 %v1606
  %1701 = vmatpush.msra.mxu0 %v1604
  %1702 = vmatpush.msra.mxu0 %v1602
  %1703 = vmatpush.msra.mxu0 %v1600
  %1704 = vmatpush.msra.mxu0 %v1598
  %1705 = vmatpush.msra.mxu0 %v1596
  %1706 = vmatpush.msra.mxu0 %v1594
  %1707 = vmatpush.msra.mxu0 %v1592
  %1708 = vmatmul.f32.gmra.mxu0 %v1669
  %v1709 = vpop.f32.mrf.mxu0
  %v1710 = vadd.f32 %v1690, %v1709
  %1711 = vdwg.mxu0
  %1712 = vmatpush.msra.mxu0 %v1591
  %1713 = vmatpush.msra.mxu0 %v1589
  %1714 = vmatpush.msra.mxu0 %v1587
  %1715 = vmatpush.msra.mxu0 %v1585
  %1716 = vmatpush.msra.mxu0 %v1583
  %1717 = vmatpush.msra.mxu0 %v1581
  %1718 = vmatpush.msra.mxu0 %v1579
  %1719 = vmatpush.msra.mxu0 %v1577
  %1720 = vmatpush.msra.mxu0 %v1575
  %1721 = vmatpush.msra.mxu0 %v1573
  %1722 = vmatpush.msra.mxu0 %v1571
  %1723 = vmatpush.msra.mxu0 %v1569
  %1724 = vmatpush.msra.mxu0 %v1567
  %1725 = vmatpush.msra.mxu0 %v1565
  %1726 = vmatpush.msra.mxu0 %v1563
  %1727 = vmatpush.msra.mxu0 %v1561
  %1728 = vmatmul.f32.gmra.mxu0 %v1668
  %v1729 = vpop.f32.mrf.mxu0
  %v1730 = vadd.f32 %v1660, %v1729
  %1731 = vdwg.mxu0
  %1732 = vmatpush.msra.mxu0 %v1623
  %1733 = vmatpush.msra.mxu0 %v1621
  %1734 = vmatpush.msra.mxu0 %v1619
  %1735 = vmatpush.msra.mxu0 %v1617
  %1736 = vmatpush.msra.mxu0 %v1615
  %1737 = vmatpush.msra.mxu0 %v1613
  %1738 = vmatpush.msra.mxu0 %v1611
  %1739 = vmatpush.msra.mxu0 %v1609
  %1740 = vmatpush.msra.mxu0 %v1607
  %1741 = vmatpush.msra.mxu0 %v1605
  %1742 = vmatpush.msra.mxu0 %v1603
  %1743 = vmatpush.msra.mxu0 %v1601
  %1744 = vmatpush.msra.mxu0 %v1599
  %1745 = vmatpush.msra.mxu0 %v1597
  %1746 = vmatpush.msra.mxu0 %v1595
  %1747 = vmatpush.msra.mxu0 %v1593
  %1748 = vmatmul.f32.gmra.mxu0 %v1669
  %v1749 = vpop.f32.mrf.mxu0
  %v1750 = vadd.f32 %v1730, %v1749
  %1751 = vdwg.mxu0
  %v1752 = vmax.f32 %v1710, 0.0
  %v1753 = vmax.f32 %v1750, 0.0
  %v1754 = vld [vmem:[%s5 + $0x10] ss:$0 sm:$0xff]
  %1755 = vmatpush.msra.mxu0 %v1639
  %1756 = vmatpush.msra.mxu0 %v1638
  %1757 = vmatpush.msra.mxu0 %v1637
  %1758 = vmatpush.msra.mxu0 %v1636
  %1759 = vmatpush.msra.mxu0 %v1635
  %1760 = vmatpush.msra.mxu0 %v1634
  %1761 = vmatpush.msra.mxu0 %v1633
  %1762 = vmatpush.msra.mxu0 %v1632
  %1763 = vmatpush.msra.mxu0 %v1631
  %1764 = vmatpush.msra.mxu0 %v1630
  %1765 = vmatpush.msra.mxu0 %v1629
  %1766 = vmatpush.msra.mxu0 %v1628
  %1767 = vmatpush.msra.mxu0 %v1627
  %1768 = vmatpush.msra.mxu0 %v1626
  %1769 = vmatpush.msra.mxu0 %v1625
  %1770 = vmatpush.msra.mxu0 %v1624
  %1771 = vmatmul.f32.gmra.mxu0 %v1752
  %v1772 = vpop.f32.mrf.mxu0
  %v1773 = vadd.f32 %v1754, %v1772
  %1774 = vdwg.mxu0
  %1775 = vmatpush.msra.mxu0 %v1655
  %1776 = vmatpush.msra.mxu0 %v1654
  %1777 = vmatpush.msra.mxu0 %v1653
  %1778 = vmatpush.msra.mxu0 %v1652
  %1779 = vmatpush.msra.mxu0 %v1651
  %1780 = vmatpush.msra.mxu0 %v1650
  %1781 = vmatpush.msra.mxu0 %v1649
  %1782 = vmatpush.msra.mxu0 %v1648
  %1783 = vmatpush.msra.mxu0 %v1647
  %1784 = vmatpush.msra.mxu0 %v1646
  %1785 = vmatpush.msra.mxu0 %v1645
  %1786 = vmatpush.msra.mxu0 %v1644
  %1787 = vmatpush.msra.mxu0 %v1643
  %1788 = vmatpush.msra.mxu0 %v1642
  %1789 = vmatpush.msra.mxu0 %v1641
  %1790 = vmatpush.msra.mxu0 %v1640
  %1791 = vmatmul.f32.gmra.mxu0 %v1753
  %v1792 = vpop.f32.mrf.mxu0
  %v1793 = vadd.f32 %v1773, %v1792
  %1794 = vdwg.mxu0
  %vm1795 = vcmask 1024
  %1796 = vst.msk [vmem:[%s7] sm:$0x3] %vm1795, %v1793
  // Predicated region
  $region30: #{discriminator_pallas.1} parent=0 // pred_check
    _
  $region31: #{discriminator_pallas.1} parent=0 // pred_check_branch
    %1798 = sbr.rel (0) target = $region33
  $region32: #{discriminator_pallas.1} parent=0 // pred_region
    _
  $region33: #{discriminator_pallas.1} parent=0 // pred_fallthru
    _
  // Predicated region
  $region34: #{discriminator_pallas.1} parent=0 // pred_check
    _
  $region35: #{discriminator_pallas.1} parent=0 // pred_check_branch
    %1800 = sbr.rel (0) target = $region37
  $region36: #{discriminator_pallas.1} parent=0 // pred_region
    _
  $region37: #{discriminator_pallas.1} parent=0 // pred_fallthru
    _

</llo_original>
